<compile_context>
chip_gen: v5e
topology: v5e:2x2
jax: 0.10.0
libtpu: 0.0.40
codegen_flags: <defaults>
</compile_context>

<pallas_src>
import jax
import jax.numpy as jnp
from jax.experimental import pallas as pl
from jax.experimental.pallas import tpu as pltpu

BN_EPS = 1e-5
C_PAD = 128      # lane-dense channel dimension (all layer widths padded to this)
G_PAD = 8        # sublane-dense graph (pool) dimension


def _round_up(v, m):
    return (v + m - 1) // m * m


def _pad2(a, rows, cols):
    out = jnp.zeros((rows, cols), a.dtype)
    return out.at[: a.shape[0], : a.shape[1]].set(a)


def _pick_tile(n_pad, preferred):
    # n_pad is always a multiple of 128, so 128 is a guaranteed fallback.
    for t in (preferred, 256, 128):
        if t <= n_pad and n_pad % t == 0:
            return t
    return n_pad


def _vmem_limit_bytes():
    # Generation-aware budget: ~52 MiB on v7x (64 MiB physical), up to ~100 MiB
    # on v5e/v6e (128 MiB physical). Leave headroom for compiler scratch.
    try:
        cap = int(pltpu.get_tpu_info().vmem_capacity_bytes)
    except Exception:
        cap = 64 * 1024 * 1024
    return max(32 * 1024 * 1024, min(cap - 12 * 1024 * 1024, 100 * 1024 * 1024))


def cluster_gcn_forward(x, A, P, params, *, tm_pref=256, tk_pref=512):
    """Fused forward: (nb_layers-1) x (SAGEConv+BN+ReLU) + SAGEConv + mean-pool.

    x: [N, C_in] node features, A: [N, N] row-normalized adjacency,
    P: [G, N] mean-pool matrix, params: list of per-layer dicts.
    """
    N, _ = x.shape
    G = P.shape[0]
    out_ch = params[-1]["Wl"].shape[1]
    L = len(params)
    L_HID = L - 1                      # layers with BN + ReLU
    assert L_HID >= 1
    assert G <= G_PAD

    N_pad = _round_up(max(N, 8), 128)
    TM = _pick_tile(N_pad, tm_pref)
    TK = _pick_tile(N_pad, tk_pref)
    n_i = N_pad // TM
    n_k = N_pad // TK

    vmem_limit = _vmem_limit_bytes()

    # Keep A resident in VMEM across layers when it (plus activations) fits
    # comfortably; otherwise re-stream it from HBM every layer.
    a_bytes = N_pad * N_pad * 2            # bf16 adjacency
    xbuf_bytes = 2 * N_pad * C_PAD * 2     # bf16 activation double-buffer
    a_resident = (a_bytes + xbuf_bytes) <= int(vmem_limit * 0.5)

    # ---- JAX glue: fold eval-mode BN into weights, pad to lane-dense shapes ----
    wl_list, wr_list, b_list = [], [], []
    for j, p in enumerate(params):
        if j < L - 1:                  # hidden layer: fold eval-mode BatchNorm
            s = p["gamma"] * jax.lax.rsqrt(p["rvar"] + BN_EPS)      # [1, C_out]
            wl = p["Wl"] * s
            wr = p["Wr"] * s
            b = s * (p["bl"] - p["rmean"]) + p["beta"]
        else:                          # final SAGEConv: no norm
            wl, wr, b = p["Wl"], p["Wr"], p["bl"]
        wl_list.append(_pad2(wl, C_PAD, C_PAD))
        wr_list.append(_pad2(wr, C_PAD, C_PAD))
        b_list.append(_pad2(b, 1, C_PAD))
    Wl_s = jnp.stack(wl_list)          # [L, 128, 128] f32
    Wr_s = jnp.stack(wr_list)          # [L, 128, 128] f32
    B_s = jnp.stack(b_list)            # [L, 1, 128]   f32

    x0_bf16 = _pad2(x.astype(jnp.float32), N_pad, C_PAD).astype(jnp.bfloat16)
    A_pad = _pad2(A.astype(jnp.float32), N_pad, N_pad)
    P_pad = _pad2(P.astype(jnp.float32), G_PAD, N_pad)
    PA_bf16 = (P_pad @ A_pad).astype(jnp.bfloat16)   # fold mean-pool into final agg
    P_bf16 = P_pad.astype(jnp.bfloat16)
    A_bf16 = A_pad.astype(jnp.bfloat16)              # bf16 A stream (MXU single-pass)

    def kernel(a_ref, x0_ref, wl_ref, wr_ref, b_ref, pa_ref, p_ref, out_ref,
               *scratch):
        if a_resident:
            xbuf, acc, pool_agg, pool_x, a_vmem = scratch
        else:
            xbuf, acc, pool_agg, pool_x = scratch

        l = pl.program_id(0)
        i = pl.program_id(1)
        k = pl.program_id(2)
        roff = pl.multiple_of(i * TM, TM)
        koff = pl.multiple_of(k * TK, TK)

        # One-time HBM -> VMEM copy of the (padded, bf16) input features.
        @pl.when((l == 0) & (i == 0) & (k == 0))
        def _():
            pltpu.sync_copy(x0_ref, xbuf.at[0])

        cur = l % 2                    # buffer holding this layer's input
        nxt = 1 - cur                  # buffer receiving this layer's output

        if a_resident:
            # Capture A into VMEM while streaming layer 0; reuse for layers >= 1
            # (their A index_map is constant, so no HBM re-fetch happens).
            @pl.when(l == 0)
            def _():
                a_vmem[pl.ds(roff, TM), pl.ds(koff, TK)] = a_ref[...]
            a_tile = a_vmem[pl.ds(roff, TM), pl.ds(koff, TK)]
        else:
            a_tile = a_ref[...]

        # Neighbor-mean aggregation: bf16 x bf16 on the MXU, f32 accumulation.
        prod = jnp.dot(a_tile, xbuf[cur, pl.ds(koff, TK), :],
                       preferred_element_type=jnp.float32)

        @pl.when(k == 0)
        def _():
            acc[...] = prod            # init with first product (no zero-fill)

        @pl.when(k > 0)
        def _():
            acc[...] += prod

        # End of the k reduction: apply folded (SAGE + BN) weights + bias, ReLU,
        # mask padded rows, write this row tile of the next layer's activations.
        @pl.when(k == n_k - 1)
        def _():
            x_i = xbuf[cur, pl.ds(roff, TM), :].astype(jnp.float32)
            h = (jnp.dot(acc[...], wl_ref[l], preferred_element_type=jnp.float32)
                 + jnp.dot(x_i, wr_ref[l], preferred_element_type=jnp.float32)
                 + b_ref[l])
            # TODO(synk): dropout(p=0.2) is identity in eval mode.
            rows = roff + jax.lax.broadcasted_iota(jnp.int32, (TM, 1), 0)
            y = jnp.where(rows < N, jnp.maximum(h, 0.0), 0.0)
            y_bf16 = y.astype(jnp.bfloat16)
            xbuf[nxt, pl.ds(roff, TM), :] = y_bf16

            # Final SAGEConv fused with global_mean_pool, accumulated per row
            # tile so it overlaps the last layer's sweep:
            #   out = (P@A) @ (x @ Wl) + (P @ x) @ Wr + b
            @pl.when(l == L_HID - 1)
            def _():
                c_agg = jnp.dot(pa_ref[...], y_bf16,
                                preferred_element_type=jnp.float32)
                c_x = jnp.dot(p_ref[...], y_bf16,
                              preferred_element_type=jnp.float32)

                @pl.when(i == 0)
                def _():
                    pool_agg[...] = c_agg
                    pool_x[...] = c_x

                @pl.when(i > 0)
                def _():
                    pool_agg[...] += c_agg
                    pool_x[...] += c_x

                @pl.when(i == n_i - 1)
                def _():
                    out_ref[...] = (
                        jnp.dot(pool_agg[...], wl_ref[L_HID],
                                preferred_element_type=jnp.float32)
                        + jnp.dot(pool_x[...], wr_ref[L_HID],
                                  preferred_element_type=jnp.float32)
                        + b_ref[L_HID])

    def full(shape):
        return pl.BlockSpec(shape, lambda l, i, k, _s=shape: (0,) * len(_s))

    if a_resident:
        # Stream A tiles only for layer 0; constant block afterwards (no re-DMA).
        a_index_map = lambda l, i, k: (jnp.where(l == 0, i, 0),
                                       jnp.where(l == 0, k, 0))
    else:
        a_index_map = lambda l, i, k: (i, k)
    # NOTE: if a profile shows exposed DMA at tile/layer boundaries in the
    # non-resident case, add pipeline_mode=pl.Buffered(3) to the A BlockSpec.

    in_specs = [
        pl.BlockSpec((TM, TK), a_index_map),                 # A (bf16, streamed)
        pl.BlockSpec(memory_space=pl.ANY),                   # x0 (raw HBM, DMA'd once)
        full((L, C_PAD, C_PAD)),                             # folded Wl stack
        full((L, C_PAD, C_PAD)),                             # folded Wr stack
        full((L, 1, C_PAD)),                                 # folded bias stack
        pl.BlockSpec((G_PAD, TM), lambda l, i, k: (0, i)),   # P @ A (per row tile)
        pl.BlockSpec((G_PAD, TM), lambda l, i, k: (0, i)),   # P     (per row tile)
    ]

    scratch = [
        pltpu.VMEM((2, N_pad, C_PAD), jnp.bfloat16),         # activation double-buffer
        pltpu.VMEM((TM, C_PAD), jnp.float32),                # aggregation accumulator
        pltpu.VMEM((G_PAD, C_PAD), jnp.float32),             # pooled (P@A)@x accumulator
        pltpu.VMEM((G_PAD, C_PAD), jnp.float32),             # pooled P@x accumulator
    ]
    if a_resident:
        scratch.append(pltpu.VMEM((N_pad, N_pad), jnp.bfloat16))  # resident A

    out_pad = pl.pallas_call(
        kernel,
        out_shape=jax.ShapeDtypeStruct((G_PAD, C_PAD), jnp.float32),
        grid_spec=pltpu.PrefetchScalarGridSpec(
            num_scalar_prefetch=0,
            grid=(L_HID, n_i, n_k),
            in_specs=in_specs,
            out_specs=full((G_PAD, C_PAD)),
            scratch_shapes=scratch,
        ),
        compiler_params=pltpu.CompilerParams(
            # Row axis must stay "arbitrary": layer l+1 reads ALL rows of layer l
            # from the core-local VMEM scratch (cross-layer dependency).
            dimension_semantics=("arbitrary", "arbitrary", "arbitrary"),
            vmem_limit_bytes=vmem_limit,
        ),
    )(A_bf16, x0_bf16, Wl_s, Wr_s, B_s, PA_bf16, P_bf16)

    return out_pad[:G, :out_ch]


def _init_params(key, in_channels, hidden_channels, out_channels, nb_layers):
    dims = [in_channels] + [hidden_channels] * (nb_layers - 1) + [out_channels]
    params = []
    for layer in range(nb_layers):
        c_in, c_out = dims[layer], dims[layer + 1]
        key, k1, k2, k3, k4, k5 = jax.random.split(key, 6)
        p = {
            "Wl": jax.random.normal(k1, (c_in, c_out), jnp.float32) * 0.1,
            "bl": jax.random.normal(k2, (1, c_out), jnp.float32) * 0.1,
            "Wr": jax.random.normal(k3, (c_in, c_out), jnp.float32) * 0.1,
        }
        if layer < nb_layers - 1:      # BatchNorm params for all but the last conv
            p["gamma"] = 1.0 + 0.1 * jax.random.normal(k4, (1, c_out), jnp.float32)
            p["beta"] = 0.1 * jax.random.normal(k5, (1, c_out), jnp.float32)
            p["rmean"] = jnp.zeros((1, c_out), jnp.float32)
            p["rvar"] = jnp.ones((1, c_out), jnp.float32)
        params.append(p)
    return params


def _reference_forward(x, A, P, params):
    # Pure-JAX f32 reference (original, unfolded math) for correctness checking.
    x = x.astype(jnp.float32)
    for p in params[:-1]:
        h = (A @ x) @ p["Wl"] + x @ p["Wr"] + p["bl"]
        y = p["gamma"] * (h - p["rmean"]) * jax.lax.rsqrt(p["rvar"] + BN_EPS) + p["beta"]
        x = jnp.maximum(y, 0.0)
    p = params[-1]
    h = (A @ x) @ p["Wl"] + x @ p["Wr"] + p["bl"]
    return P @ h


if __name__ == "__main__":
    # Small synthetic graph batch: 2 graphs of 8 nodes each (N = 16 nodes).
    N, G = 16, 2
    in_channels, hidden_channels, out_channels, nb_layers = 8, 32, 8, 6

    key = jax.random.PRNGKey(0)
    key, kx = jax.random.split(key)
    x = jax.random.normal(kx, (N, in_channels), jnp.float32)

    # Deterministic edge_index: directed ring within each graph, both directions.
    ring_src = jnp.arange(8)
    ring_dst = (jnp.arange(8) + 1) % 8
    src = jnp.concatenate([ring_src, ring_dst, ring_src + 8, ring_dst + 8])
    dst = jnp.concatenate([ring_dst, ring_src, ring_dst + 8, ring_src + 8])

    # Row-normalized dense adjacency (mean aggregation over incoming edges).
    adj = jnp.zeros((N, N), jnp.float32).at[dst, src].add(1.0)
    deg = adj.sum(axis=1, keepdims=True)
    A = jnp.where(deg > 0, adj / jnp.maximum(deg, 1.0), 0.0)

    # Batch vector -> global_mean_pool matrix.
    batch = jnp.repeat(jnp.arange(G), N // G)
    P = (batch[None, :] == jnp.arange(G)[:, None]).astype(jnp.float32)
    P = P / jnp.maximum(P.sum(axis=1, keepdims=True), 1.0)

    params = _init_params(key, in_channels, hidden_channels, out_channels, nb_layers)

    out = cluster_gcn_forward(x, A, P, params)
    out = jax.block_until_ready(out)

    ref = _reference_forward(x, A, P, params)
    assert out.shape == (G, out_channels)
    # A, the activations and the pool matrices are streamed/stored in bf16
    # (f32 MXU accumulation), so allow ~1e-2-level deviation vs the f32 reference.
    assert jnp.allclose(out, ref, atol=5e-2, rtol=5e-2), (out, ref)

    print("KERNEL_OK")
</pallas_src>

<mosaic_0001>
module attributes {stable_mosaic.version = 11 : i64} {
  func.func @kernel(%arg0: i32, %arg1: i32, %arg2: i32, %arg3: memref<128x128xbf16, #tpu.memory_space<vmem>>, %arg4: memref<128x128xbf16, #tpu.memory_space<any>>, %arg5: memref<6x128x128xf32, #tpu.memory_space<vmem>>, %arg6: memref<6x128x128xf32, #tpu.memory_space<vmem>>, %arg7: memref<6x1x128xf32, #tpu.memory_space<vmem>>, %arg8: memref<8x128xbf16, #tpu.memory_space<vmem>>, %arg9: memref<8x128xbf16, #tpu.memory_space<vmem>>, %arg10: memref<8x128xf32, #tpu.memory_space<vmem>>, %arg11: memref<2x128x128xbf16, #tpu.memory_space<vmem>>, %arg12: memref<128x128xf32, #tpu.memory_space<vmem>>, %arg13: memref<8x128xf32, #tpu.memory_space<vmem>>, %arg14: memref<8x128xf32, #tpu.memory_space<vmem>>, %arg15: memref<128x128xbf16, #tpu.memory_space<vmem>>) attributes {dimension_semantics = [#tpu.dimension_semantics<arbitrary>, #tpu.dimension_semantics<arbitrary>, #tpu.dimension_semantics<arbitrary>], iteration_bounds = array<i64: 5, 1, 1>, scalar_prefetch = 0 : i64, scratch_operands = 5 : i64, tpu.core_type = #tpu.core_type<tc>, window_params = [{transform_indices = @transform_0, window_bounds = array<i64: 128, 128>}, {}, {pipeline_mode = #tpu.pipeline_mode<synchronous>, transform_indices = @transform_2, window_bounds = array<i64: 6, 128, 128>}, {pipeline_mode = #tpu.pipeline_mode<synchronous>, transform_indices = @transform_3, window_bounds = array<i64: 6, 128, 128>}, {pipeline_mode = #tpu.pipeline_mode<synchronous>, transform_indices = @transform_4, window_bounds = array<i64: 6, 1, 128>}, {transform_indices = @transform_5, window_bounds = array<i64: 8, 128>}, {transform_indices = @transform_6, window_bounds = array<i64: 8, 128>}, {pipeline_mode = #tpu.pipeline_mode<synchronous>, transform_indices = @transform_7, window_bounds = array<i64: 8, 128>}]} {
    %c128_i32 = arith.constant 128 : i32
    %0 = arith.muli %arg1, %c128_i32 : i32
    %1 = tpu.assume_multiple %0, 128 : i32
    %c128_i32_0 = arith.constant 128 : i32
    %2 = arith.muli %arg2, %c128_i32_0 : i32
    %3 = tpu.assume_multiple %2, 128 : i32
    %c0_i32 = arith.constant 0 : i32
    %4 = arith.cmpi eq, %arg0, %c0_i32 : i32
    %c0_i32_1 = arith.constant 0 : i32
    %5 = arith.cmpi eq, %arg1, %c0_i32_1 : i32
    %6 = arith.andi %4, %5 : i1
    %c0_i32_2 = arith.constant 0 : i32
    %7 = arith.cmpi eq, %arg2, %c0_i32_2 : i32
    %8 = arith.andi %6, %7 : i1
    %9 = arith.extui %8 : i1 to i32
    %c0_i32_3 = arith.constant 0 : i32
    %10 = arith.cmpi ne, %9, %c0_i32_3 : i32
    scf.if %10 {
      %c0_i32_17 = arith.constant 0 : i32
      "tpu.region"() ({
        %42 = tpu.sem_alloc : memref<!tpu.dma_semaphore, #tpu.memory_space<semaphore_mem>>
        %c0_i32_18 = arith.constant 0 : i32
        %c0_i32_19 = arith.constant 0 : i32
        %43 = tpu.memref_slice %arg11[%c0_i32_17, %c0_i32_18, %c0_i32_19] : memref<2x128x128xbf16, #tpu.memory_space<vmem>> -> memref<1x128x128xbf16, #tpu.memory_space<vmem>>
        %44 = tpu.memref_squeeze %43 : memref<1x128x128xbf16, #tpu.memory_space<vmem>> -> memref<128x128xbf16, #tpu.memory_space<vmem>>
        tpu.enqueue_dma source(%arg4 : memref<128x128xbf16, #tpu.memory_space<any>>) target(%44 : memref<128x128xbf16, #tpu.memory_space<vmem>>) target_semaphore(%42 : memref<!tpu.dma_semaphore, #tpu.memory_space<semaphore_mem>>)
        %c0_i32_20 = arith.constant 0 : i32
        %c0_i32_21 = arith.constant 0 : i32
        %45 = tpu.memref_slice %arg11[%c0_i32_17, %c0_i32_20, %c0_i32_21] : memref<2x128x128xbf16, #tpu.memory_space<vmem>> -> memref<1x128x128xbf16, #tpu.memory_space<vmem>>
        %46 = tpu.memref_squeeze %45 : memref<1x128x128xbf16, #tpu.memory_space<vmem>> -> memref<128x128xbf16, #tpu.memory_space<vmem>>
        tpu.wait_dma2 semaphore(%42 : memref<!tpu.dma_semaphore, #tpu.memory_space<semaphore_mem>>) src(%arg4 : memref<128x128xbf16, #tpu.memory_space<any>>) dst(%46 : memref<128x128xbf16, #tpu.memory_space<vmem>>)
        tpu.yield
      }) : () -> ()
    } else {
    }
    %c2_i32 = arith.constant 2 : i32
    %c0_i32_4 = arith.constant 0 : i32
    %11 = arith.cmpi eq, %c2_i32, %c0_i32_4 : i32
    %c1_i32 = arith.constant 1 : i32
    %12 = arith.select %11, %c1_i32, %c2_i32 : i32
    %13 = arith.remsi %arg0, %12 : i32
    %c0_i32_5 = arith.constant 0 : i32
    %14 = arith.cmpi ne, %13, %c0_i32_5 : i32
    %c0_i32_6 = arith.constant 0 : i32
    %15 = arith.cmpi slt, %13, %c0_i32_6 : i32
    %c0_i32_7 = arith.constant 0 : i32
    %16 = arith.cmpi slt, %12, %c0_i32_7 : i32
    %17 = arith.xori %15, %16 : i1
    %18 = arith.andi %17, %14 : i1
    %19 = arith.addi %13, %12 : i32
    %20 = arith.select %18, %19, %13 : i32
    %c1_i32_8 = arith.constant 1 : i32
    %21 = arith.subi %c1_i32_8, %20 : i32
    %c0_i32_9 = arith.constant 0 : i32
    %22 = arith.cmpi eq, %arg0, %c0_i32_9 : i32
    %23 = arith.extui %22 : i1 to i32
    %c0_i32_10 = arith.constant 0 : i32
    %24 = arith.cmpi ne, %23, %c0_i32_10 : i32
    scf.if %24 {
      %c0_17 = arith.constant 0 : index
      %c0_18 = arith.constant 0 : index
      %42 = vector.load %arg3[%c0_17, %c0_18] : memref<128x128xbf16, #tpu.memory_space<vmem>>, vector<128x128xbf16>
      %43 = arith.index_cast %1 : i32 to index
      %44 = arith.index_cast %3 : i32 to index
      %45 = vector.load %arg15[%43, %44] : memref<128x128xbf16, #tpu.memory_space<vmem>>, vector<128x128xbf16>
      tpu.vector_store %arg15[%43, %44], %42 {strides = array<i32>} : memref<128x128xbf16, #tpu.memory_space<vmem>>, vector<128x128xbf16>,
    } else {
    }
    %25 = arith.index_cast %1 : i32 to index
    %26 = arith.index_cast %3 : i32 to index
    %27 = vector.load %arg15[%25, %26] : memref<128x128xbf16, #tpu.memory_space<vmem>>, vector<128x128xbf16>
    %28 = arith.index_cast %20 : i32 to index
    %29 = arith.index_cast %3 : i32 to index
    %c0 = arith.constant 0 : index
    %30 = vector.load %arg11[%28, %29, %c0] : memref<2x128x128xbf16, #tpu.memory_space<vmem>>, vector<1x128x128xbf16>
    %31 = vector.shape_cast %30 : vector<1x128x128xbf16> to vector<128x128xbf16>
    %cst = arith.constant dense<0.000000e+00> : vector<128x128xf32>
    %32 = tpu.matmul %27, %31, %cst {dimension_numbers = #tpu.dot_dimension_numbers<[1], [0], [0], [1], [0, 0, 1, 1], [], []>} : vector<128x128xbf16>, vector<128x128xbf16>, vector<128x128xf32> -> vector<128x128xf32>
    %c0_i32_11 = arith.constant 0 : i32
    %33 = arith.cmpi eq, %arg2, %c0_i32_11 : i32
    %34 = arith.extui %33 : i1 to i32
    %c0_i32_12 = arith.constant 0 : i32
    %35 = arith.cmpi ne, %34, %c0_i32_12 : i32
    scf.if %35 {
      %c0_17 = arith.constant 0 : index
      %c0_18 = arith.constant 0 : index
      %42 = vector.load %arg12[%c0_17, %c0_18] : memref<128x128xf32, #tpu.memory_space<vmem>>, vector<128x128xf32>
      tpu.vector_store %arg12[%c0_17, %c0_18], %32 {strides = array<i32>} : memref<128x128xf32, #tpu.memory_space<vmem>>, vector<128x128xf32>,
    } else {
    }
    %c0_i32_13 = arith.constant 0 : i32
    %36 = arith.cmpi sgt, %arg2, %c0_i32_13 : i32
    %37 = arith.extui %36 : i1 to i32
    %c0_i32_14 = arith.constant 0 : i32
    %38 = arith.cmpi ne, %37, %c0_i32_14 : i32
    scf.if %38 {
      %c0_17 = arith.constant 0 : index
      %c0_18 = arith.constant 0 : index
      %42 = vector.load %arg12[%c0_17, %c0_18] : memref<128x128xf32, #tpu.memory_space<vmem>>, vector<128x128xf32>
      %43 = arith.addf %42, %32 : vector<128x128xf32>
      %c0_19 = arith.constant 0 : index
      %c0_20 = arith.constant 0 : index
      %44 = vector.load %arg12[%c0_19, %c0_20] : memref<128x128xf32, #tpu.memory_space<vmem>>, vector<128x128xf32>
      tpu.vector_store %arg12[%c0_19, %c0_20], %43 {strides = array<i32>} : memref<128x128xf32, #tpu.memory_space<vmem>>, vector<128x128xf32>,
    } else {
    }
    %c0_i32_15 = arith.constant 0 : i32
    %39 = arith.cmpi eq, %arg2, %c0_i32_15 : i32
    %40 = arith.extui %39 : i1 to i32
    %c0_i32_16 = arith.constant 0 : i32
    %41 = arith.cmpi ne, %40, %c0_i32_16 : i32
    scf.if %41 {
      %42 = arith.index_cast %20 : i32 to index
      %43 = arith.index_cast %1 : i32 to index
      %c0_17 = arith.constant 0 : index
      %44 = vector.load %arg11[%42, %43, %c0_17] : memref<2x128x128xbf16, #tpu.memory_space<vmem>>, vector<1x128x128xbf16>
      %45 = vector.shape_cast %44 : vector<1x128x128xbf16> to vector<128x128xbf16>
      %46 = arith.extf %45 : vector<128x128xbf16> to vector<128x128xf32>
      %c0_18 = arith.constant 0 : index
      %c0_19 = arith.constant 0 : index
      %47 = vector.load %arg12[%c0_18, %c0_19] : memref<128x128xf32, #tpu.memory_space<vmem>>, vector<128x128xf32>
      %48 = arith.index_cast %arg0 : i32 to index
      %c0_20 = arith.constant 0 : index
      %c0_21 = arith.constant 0 : index
      %49 = vector.load %arg5[%48, %c0_20, %c0_21] : memref<6x128x128xf32, #tpu.memory_space<vmem>>, vector<1x128x128xf32>
      %50 = vector.shape_cast %49 : vector<1x128x128xf32> to vector<128x128xf32>
      %cst_22 = arith.constant dense<0.000000e+00> : vector<128x128xf32>
      %51 = tpu.matmul %47, %50, %cst_22 {dimension_numbers = #tpu.dot_dimension_numbers<[1], [0], [0], [1], [0, 0, 1, 1], [], []>} : vector<128x128xf32>, vector<128x128xf32>, vector<128x128xf32> -> vector<128x128xf32>
      %52 = arith.index_cast %arg0 : i32 to index
      %c0_23 = arith.constant 0 : index
      %c0_24 = arith.constant 0 : index
      %53 = vector.load %arg6[%52, %c0_23, %c0_24] : memref<6x128x128xf32, #tpu.memory_space<vmem>>, vector<1x128x128xf32>
      %54 = vector.shape_cast %53 : vector<1x128x128xf32> to vector<128x128xf32>
      %cst_25 = arith.constant dense<0.000000e+00> : vector<128x128xf32>
      %55 = tpu.matmul %46, %54, %cst_25 {dimension_numbers = #tpu.dot_dimension_numbers<[1], [0], [0], [1], [0, 0, 1, 1], [], []>} : vector<128x128xf32>, vector<128x128xf32>, vector<128x128xf32> -> vector<128x128xf32>
      %56 = arith.addf %51, %55 : vector<128x128xf32>
      %57 = arith.index_cast %arg0 : i32 to index
      %c0_26 = arith.constant 0 : index
      %c0_27 = arith.constant 0 : index
      %58 = vector.load %arg7[%57, %c0_26, %c0_27] : memref<6x1x128xf32, #tpu.memory_space<vmem>>, vector<1x1x128xf32>
      %59 = vector.shape_cast %58 : vector<1x1x128xf32> to vector<1x128xf32>
      %60 = vector.broadcast %59 : vector<1x128xf32> to vector<128x128xf32>
      %61 = arith.addf %56, %60 : vector<128x128xf32>
      %62 = tpu.iota {dimensions = array<i32: 0>} : vector<128x1xi32>
      %63 = vector.broadcast %1 : i32 to vector<128x1xi32>
      %64 = arith.addi %63, %62 : vector<128x1xi32>
      %c16_i32 = arith.constant 16 : i32
      %65 = vector.broadcast %c16_i32 : i32 to vector<128x1xi32>
      %66 = arith.cmpi slt, %64, %65 : vector<128x1xi32>
      %cst_28 = arith.constant 0.000000e+00 : f32
      %67 = vector.broadcast %cst_28 : f32 to vector<128x128xf32>
      %68 = arith.maximumf %61, %67 : vector<128x128xf32>
      %cst_29 = arith.constant 0.000000e+00 : f32
      %69 = vector.shape_cast %66 : vector<128x1xi1> to vector<128x1xi1>
      %70 = vector.broadcast %69 : vector<128x1xi1> to vector<128x128xi1>
      %71 = vector.broadcast %cst_29 : f32 to vector<128x128xf32>
      %72 = arith.select %70, %68, %71 : vector<128x128xi1>, vector<128x128xf32>
      %73 = arith.truncf %72 : vector<128x128xf32> to vector<128x128xbf16>
      %74 = arith.index_cast %21 : i32 to index
      %75 = arith.index_cast %1 : i32 to index
      %c0_30 = arith.constant 0 : index
      %76 = vector.load %arg11[%74, %75, %c0_30] : memref<2x128x128xbf16, #tpu.memory_space<vmem>>, vector<1x128x128xbf16>
      %77 = vector.shape_cast %76 : vector<1x128x128xbf16> to vector<128x128xbf16>
      %78 = vector.shape_cast %73 : vector<128x128xbf16> to vector<1x128x128xbf16>
      tpu.vector_store %arg11[%74, %75, %c0_30], %78 {strides = array<i32>} : memref<2x128x128xbf16, #tpu.memory_space<vmem>>, vector<1x128x128xbf16>,
      %c4_i32 = arith.constant 4 : i32
      %79 = arith.cmpi eq, %arg0, %c4_i32 : i32
      %80 = arith.extui %79 : i1 to i32
      %c0_i32_31 = arith.constant 0 : i32
      %81 = arith.cmpi ne, %80, %c0_i32_31 : i32
      scf.if %81 {
        %c0_32 = arith.constant 0 : index
        %c0_33 = arith.constant 0 : index
        %82 = vector.load %arg8[%c0_32, %c0_33] : memref<8x128xbf16, #tpu.memory_space<vmem>>, vector<8x128xbf16>
        %cst_34 = arith.constant dense<0.000000e+00> : vector<8x128xf32>
        %83 = tpu.matmul %82, %73, %cst_34 {dimension_numbers = #tpu.dot_dimension_numbers<[1], [0], [0], [1], [0, 0, 1, 1], [], []>} : vector<8x128xbf16>, vector<128x128xbf16>, vector<8x128xf32> -> vector<8x128xf32>
        %c0_35 = arith.constant 0 : index
        %c0_36 = arith.constant 0 : index
        %84 = vector.load %arg9[%c0_35, %c0_36] : memref<8x128xbf16, #tpu.memory_space<vmem>>, vector<8x128xbf16>
        %cst_37 = arith.constant dense<0.000000e+00> : vector<8x128xf32>
        %85 = tpu.matmul %84, %73, %cst_37 {dimension_numbers = #tpu.dot_dimension_numbers<[1], [0], [0], [1], [0, 0, 1, 1], [], []>} : vector<8x128xbf16>, vector<128x128xbf16>, vector<8x128xf32> -> vector<8x128xf32>
        %c0_i32_38 = arith.constant 0 : i32
        %86 = arith.cmpi eq, %arg1, %c0_i32_38 : i32
        %87 = arith.extui %86 : i1 to i32
        %c0_i32_39 = arith.constant 0 : i32
        %88 = arith.cmpi ne, %87, %c0_i32_39 : i32
        scf.if %88 {
          %c0_44 = arith.constant 0 : index
          %c0_45 = arith.constant 0 : index
          %95 = vector.load %arg13[%c0_44, %c0_45] : memref<8x128xf32, #tpu.memory_space<vmem>>, vector<8x128xf32>
          tpu.vector_store %arg13[%c0_44, %c0_45], %83 {strides = array<i32>} : memref<8x128xf32, #tpu.memory_space<vmem>>, vector<8x128xf32>,
          %c0_46 = arith.constant 0 : index
          %c0_47 = arith.constant 0 : index
          %96 = vector.load %arg14[%c0_46, %c0_47] : memref<8x128xf32, #tpu.memory_space<vmem>>, vector<8x128xf32>
          tpu.vector_store %arg14[%c0_46, %c0_47], %85 {strides = array<i32>} : memref<8x128xf32, #tpu.memory_space<vmem>>, vector<8x128xf32>,
        } else {
        }
        %c0_i32_40 = arith.constant 0 : i32
        %89 = arith.cmpi sgt, %arg1, %c0_i32_40 : i32
        %90 = arith.extui %89 : i1 to i32
        %c0_i32_41 = arith.constant 0 : i32
        %91 = arith.cmpi ne, %90, %c0_i32_41 : i32
        scf.if %91 {
          %c0_44 = arith.constant 0 : index
          %c0_45 = arith.constant 0 : index
          %95 = vector.load %arg13[%c0_44, %c0_45] : memref<8x128xf32, #tpu.memory_space<vmem>>, vector<8x128xf32>
          %96 = arith.addf %95, %83 : vector<8x128xf32>
          %c0_46 = arith.constant 0 : index
          %c0_47 = arith.constant 0 : index
          %97 = vector.load %arg13[%c0_46, %c0_47] : memref<8x128xf32, #tpu.memory_space<vmem>>, vector<8x128xf32>
          tpu.vector_store %arg13[%c0_46, %c0_47], %96 {strides = array<i32>} : memref<8x128xf32, #tpu.memory_space<vmem>>, vector<8x128xf32>,
          %c0_48 = arith.constant 0 : index
          %c0_49 = arith.constant 0 : index
          %98 = vector.load %arg14[%c0_48, %c0_49] : memref<8x128xf32, #tpu.memory_space<vmem>>, vector<8x128xf32>
          %99 = arith.addf %98, %85 : vector<8x128xf32>
          %c0_50 = arith.constant 0 : index
          %c0_51 = arith.constant 0 : index
          %100 = vector.load %arg14[%c0_50, %c0_51] : memref<8x128xf32, #tpu.memory_space<vmem>>, vector<8x128xf32>
          tpu.vector_store %arg14[%c0_50, %c0_51], %99 {strides = array<i32>} : memref<8x128xf32, #tpu.memory_space<vmem>>, vector<8x128xf32>,
        } else {
        }
        %c0_i32_42 = arith.constant 0 : i32
        %92 = arith.cmpi eq, %arg1, %c0_i32_42 : i32
        %93 = arith.extui %92 : i1 to i32
        %c0_i32_43 = arith.constant 0 : i32
        %94 = arith.cmpi ne, %93, %c0_i32_43 : i32
        scf.if %94 {
          %c0_44 = arith.constant 0 : index
          %c0_45 = arith.constant 0 : index
          %95 = vector.load %arg13[%c0_44, %c0_45] : memref<8x128xf32, #tpu.memory_space<vmem>>, vector<8x128xf32>
          %c5 = arith.constant 5 : index
          %c0_46 = arith.constant 0 : index
          %c0_47 = arith.constant 0 : index
          %96 = vector.load %arg5[%c5, %c0_46, %c0_47] : memref<6x128x128xf32, #tpu.memory_space<vmem>>, vector<1x128x128xf32>
          %97 = vector.shape_cast %96 : vector<1x128x128xf32> to vector<128x128xf32>
          %cst_48 = arith.constant dense<0.000000e+00> : vector<8x128xf32>
          %98 = tpu.matmul %95, %97, %cst_48 {dimension_numbers = #tpu.dot_dimension_numbers<[1], [0], [0], [1], [0, 0, 1, 1], [], []>} : vector<8x128xf32>, vector<128x128xf32>, vector<8x128xf32> -> vector<8x128xf32>
          %c0_49 = arith.constant 0 : index
          %c0_50 = arith.constant 0 : index
          %99 = vector.load %arg14[%c0_49, %c0_50] : memref<8x128xf32, #tpu.memory_space<vmem>>, vector<8x128xf32>
          %c5_51 = arith.constant 5 : index
          %c0_52 = arith.constant 0 : index
          %c0_53 = arith.constant 0 : index
          %100 = vector.load %arg6[%c5_51, %c0_52, %c0_53] : memref<6x128x128xf32, #tpu.memory_space<vmem>>, vector<1x128x128xf32>
          %101 = vector.shape_cast %100 : vector<1x128x128xf32> to vector<128x128xf32>
          %cst_54 = arith.constant dense<0.000000e+00> : vector<8x128xf32>
          %102 = tpu.matmul %99, %101, %cst_54 {dimension_numbers = #tpu.dot_dimension_numbers<[1], [0], [0], [1], [0, 0, 1, 1], [], []>} : vector<8x128xf32>, vector<128x128xf32>, vector<8x128xf32> -> vector<8x128xf32>
          %103 = arith.addf %98, %102 : vector<8x128xf32>
          %c5_55 = arith.constant 5 : index
          %c0_56 = arith.constant 0 : index
          %c0_57 = arith.constant 0 : index
          %104 = vector.load %arg7[%c5_55, %c0_56, %c0_57] : memref<6x1x128xf32, #tpu.memory_space<vmem>>, vector<1x1x128xf32>
          %105 = vector.shape_cast %104 : vector<1x1x128xf32> to vector<1x128xf32>
          %106 = vector.broadcast %105 : vector<1x128xf32> to vector<8x128xf32>
          %107 = arith.addf %103, %106 : vector<8x128xf32>
          %c0_58 = arith.constant 0 : index
          %c0_59 = arith.constant 0 : index
          %108 = vector.load %arg10[%c0_58, %c0_59] : memref<8x128xf32, #tpu.memory_space<vmem>>, vector<8x128xf32>
          tpu.vector_store %arg10[%c0_58, %c0_59], %107 {strides = array<i32>} : memref<8x128xf32, #tpu.memory_space<vmem>>, vector<8x128xf32>,
        } else {
        }
      } else {
      }
    } else {
    }
    return
  }
  func.func @transform_0(%arg0: i32, %arg1: i32, %arg2: i32) -> (i32, i32) {
    %c0_i32 = arith.constant 0 : i32
    %0 = arith.cmpi eq, %arg0, %c0_i32 : i32
    %c0_i32_0 = arith.constant 0 : i32
    %1 = arith.select %0, %arg1, %c0_i32_0 : i32
    %c0_i32_1 = arith.constant 0 : i32
    %2 = arith.cmpi eq, %arg0, %c0_i32_1 : i32
    %c0_i32_2 = arith.constant 0 : i32
    %3 = arith.select %2, %arg2, %c0_i32_2 : i32
    %c0_i32_3 = arith.constant 0 : i32
    return %1, %3 : i32, i32
  }
  func.func @transform_2(%arg0: i32, %arg1: i32, %arg2: i32) -> (i32, i32, i32) {
    %c0_i32 = arith.constant 0 : i32
    %c0_i32_0 = arith.constant 0 : i32
    %c0_i32_1 = arith.constant 0 : i32
    %c0_i32_2 = arith.constant 0 : i32
    return %c0_i32, %c0_i32_0, %c0_i32_1 : i32, i32, i32
  }
  func.func @transform_3(%arg0: i32, %arg1: i32, %arg2: i32) -> (i32, i32, i32) {
    %c0_i32 = arith.constant 0 : i32
    %c0_i32_0 = arith.constant 0 : i32
    %c0_i32_1 = arith.constant 0 : i32
    %c0_i32_2 = arith.constant 0 : i32
    return %c0_i32, %c0_i32_0, %c0_i32_1 : i32, i32, i32
  }
  func.func @transform_4(%arg0: i32, %arg1: i32, %arg2: i32) -> (i32, i32, i32) {
    %c0_i32 = arith.constant 0 : i32
    %c0_i32_0 = arith.constant 0 : i32
    %c0_i32_1 = arith.constant 0 : i32
    %c0_i32_2 = arith.constant 0 : i32
    return %c0_i32, %c0_i32_0, %c0_i32_1 : i32, i32, i32
  }
  func.func @transform_5(%arg0: i32, %arg1: i32, %arg2: i32) -> (i32, i32) {
    %c0_i32 = arith.constant 0 : i32
    %c0_i32_0 = arith.constant 0 : i32
    return %c0_i32, %arg1 : i32, i32
  }
  func.func @transform_6(%arg0: i32, %arg1: i32, %arg2: i32) -> (i32, i32) {
    %c0_i32 = arith.constant 0 : i32
    %c0_i32_0 = arith.constant 0 : i32
    return %c0_i32, %arg1 : i32, i32
  }
  func.func @transform_7(%arg0: i32, %arg1: i32, %arg2: i32) -> (i32, i32) {
    %c0_i32 = arith.constant 0 : i32
    %c0_i32_0 = arith.constant 0 : i32
    %c0_i32_1 = arith.constant 0 : i32
    return %c0_i32, %c0_i32_0 : i32, i32
  }
}

</mosaic_0001>

<llo_original>
// kernel: tpu_custom_call.1
$region0: #{tpu_custom_call.1}
  #allocation0 [shape = 'u32[]', space=smem, size = 0x4, offset = 0x4, fixed_abs, tag = 'smem constant byte address 0x4 - core index']
  #allocation1 [shape = 'u32[72,128]{1,0:T(1,128)}', space=vmem, size = 0x9000, scoped, tag = 'internal scratch']
  #allocation2 [shape = 'bf16[2,128,128]{2,1,0:T(8,128)(2,1)}', space=vmem, size = 0x10000, scoped, tag = 'scratch operand']
  #allocation3 [shape = 'f32[128,128]{1,0:T(8,128)}', space=vmem, size = 0x10000, scoped, tag = 'scratch operand']
  #allocation4 [shape = 'f32[8,128]{1,0:T(8,128)}', space=vmem, size = 0x1000, scoped, tag = 'scratch operand']
  #allocation5 [shape = 'f32[8,128]{1,0:T(8,128)}', space=vmem, size = 0x1000, scoped, tag = 'scratch operand']
  #allocation6 [shape = 'bf16[128,128]{1,0:T(8,128)(2,1)}', space=vmem, size = 0x8000, scoped, tag = 'scratch operand']
  #allocation18 [shape = 's32[]', space=sflag, size = 0x4, offset = 0, fixed_abs, tag = 'sflag constant byte address 0x0 - dummy sync flag']
  #allocation19 [shape = 's32[]', space=sflag, size = 0x4, offset = 0, fixed_abs, tag = 'sflag constant byte address 0x0 - dummy sync flag']
  #allocation20 [shape = 'u32[]', space=smem, size = 0x4, offset = 0x44, fixed_abs, tag = 'smem constant byte address 0x44 - assertion arg 0']
  #allocation21 [shape = 'u32[]', space=smem, size = 0x4, offset = 0x48, fixed_abs, tag = 'smem constant byte address 0x48 - assertion arg 1']
  %s0 = inlined_call_operand.hbm [shape: bf16[128,128], index: 0, kind: input, shape index: {}]
  %s1 = inlined_call_operand.hbm [shape: bf16[128,128], index: 1, kind: input, shape index: {}]
  %s2 = inlined_call_operand.hbm [shape: f32[6,128,128], index: 2, kind: input, shape index: {}]
  %s3 = inlined_call_operand.hbm [shape: f32[6,128,128], index: 3, kind: input, shape index: {}]
  %s4 = inlined_call_operand.hbm [shape: f32[6,1,128], index: 4, kind: input, shape index: {}]
  %s5 = inlined_call_operand.vmem [shape: bf16[8,128], index: 5, kind: input, shape index: {}]
  %s6 = inlined_call_operand.hbm [shape: bf16[8,128], index: 6, kind: input, shape index: {}]
  %s7 = inlined_call_operand.hbm [shape: f32[8,128], index: 7, kind: output, shape index: {}]
  %s8 = sld [smem:[#allocation0]]
  $region118: #{tpu_custom_call.1} parent=0
    _
  %s10 = ssub.s32 1, %s8
  %s11 = scalar_select 0, %s10, %s8
  $region1: #{tpu_custom_call.1} parent=0
    #allocation7 [shape = 'u8[65536]{0}', space=vmem, size = 0x10000, scoped, tag = 'input window, operand 0']
    #allocation8 [shape = 's32[2]{0}', space=sflag, size = 0x8, scoped, tag = 'scoped memory for tpu_custom_call.1']
    #allocation9 [shape = 's32[2]{0}', space=sflag, size = 0x8, scoped, tag = 'scoped memory for tpu_custom_call.1']
    #allocation10 [shape = 'u8[393216]{0}', space=vmem, size = 0x60000, scoped, tag = 'input window, operand 2, single buffered']
    #allocation11 [shape = 's32[1]{0}', space=sflag, size = 0x4, scoped, tag = 'scoped memory for tpu_custom_call.1']
    #allocation12 [shape = 'u8[393216]{0}', space=vmem, size = 0x60000, scoped, tag = 'input window, operand 3, single buffered']
    #allocation13 [shape = 'u8[3072]{0}', space=vmem, size = 0xc00, scoped, tag = 'input window, operand 4, single buffered']
    #allocation14 [shape = 's32[1]{0}', space=sflag, size = 0x4, scoped, tag = 'scoped memory for tpu_custom_call.1']
    #allocation15 [shape = 'u8[2048]{0}', space=vmem, size = 0x800, scoped, tag = 'input window, operand 6, single buffered']
    #allocation16 [shape = 'u8[4096]{0}', space=vmem, size = 0x1000, scoped, tag = 'output window, operand 0, single buffered']
    %12 = vsyncpa [#allocation8], 0
    %s13 = scalar_lea.sflag [#allocation8], 1
    %14 = vsyncpa %s13, 0
    %15 = vsyncpa [#allocation11], 0
    %16 = vsyncpa [#allocation14], 0
    %17 = vsyncpa [#allocation9], 0
    loop: start=0, step=1, limit=7
    $region2: #{tpu_custom_call.1} parent=1 // loop_pre_header
      _
    $region3: #{tpu_custom_call.1} parent=1 // loop_header
      %s19 = sphi 0, %s23
      %p20 = scmp.ge.s32.totalorder %s19, 7
      %s26 = sphi 0, %s45
      %s27 = sphi 0, %s41
      %s28 = sphi 0, %s37
      %s29 = sphi 0, %s26
      %s30 = sphi 0, %s27
      %s31 = sphi 0, %s28
      %s32 = sphi 0, %s29
      %s33 = sphi 0, %s30
      %s34 = sphi 0, %s31
      %s56 = sphi 0, %s58
      %s59 = sphi 0, %s56
      %s60 = sphi 0, %s59
      %s76 = sphi 0, %s60
      %s80 = sphi 0, %s80
      %s82 = sphi 0, %s80
      %s83 = sphi 0, %s82
      %s97 = sphi 0, %s83
      %s101 = sphi 0, %s101
      %s103 = sphi 0, %s101
      %s104 = sphi 0, %s103
      %s118 = sphi 0, %s104
      %s122 = sphi 0, %s122
      %s124 = sphi 0, %s122
      %s125 = sphi 0, %s124
      %s139 = sphi 0, %s125
      %s145 = sphi 0, %s147
      %s148 = sphi 0, %s145
      %s149 = sphi 0, %s148
      %s165 = sphi 0, %s149
      %s171 = sphi 0, %s173
      %s174 = sphi 0, %s171
      %s175 = sphi 0, %s174
      %s191 = sphi 0, %s175
      %s195 = sphi 0, %s195
      %s197 = sphi 0, %s195
      %s198 = sphi 0, %s197
      %s212 = sphi 0, %s198
    $region4: #{tpu_custom_call.1} parent=1 // loop_header_branch
      %22 = sbr.rel (%p20) target = $region8
    $region5: #{tpu_custom_call.1} parent=1 // loop_body
      %s24 = ssub.s32 %s19, 1
      %s25 = ssub.s32 %s19, 2
      %s35 = sadd.s32 1, %s28
      %p36 = scmp.ge.s32.totalorder %s35, 1
      %s37 = scalar_select %p36, 0, %s35
      %s38 = sadd.s32 1, %s27
      %s39 = scalar_select %p36, %s38, %s27
      %p40 = scmp.ge.s32.totalorder %s39, 1
      %s41 = scalar_select %p40, 0, %s39
      %s42 = sadd.s32 1, %s26
      %s43 = scalar_select %p40, %s42, %s26
      %p44 = scmp.ge.s32.totalorder %s43, 5
      %s45 = scalar_select %p44, 0, %s43
      %p46 = scmp.eq.s32.totalorder %s26, 0
      %s47 = scalar_select %p46, %s27, 0
      %s48 = scalar_select %p46, %s28, 0
      %p49 = scmp.eq.s32.totalorder %s45, 0
      %s50 = scalar_select %p49, %s41, 0
      %s51 = scalar_select %p49, %s37, 0
      %s52 = ssub.s32 %s47, %s50
      %s53 = ssub.s32 %s48, %s51
      %s54 = sor.u32 %s52, %s53
      %p55 = scmp.eq.s32.totalorder %s54, 0
      %s57 = sadd.s32 %s56, 1
      %s58 = scalar_select %p55, %s56, %s57
      %p61 = pneg %p55
      %p62 = scmp.eq.s32.totalorder %s19, 4
      %p63 = por %p61, %p62
      %p64 = scmp.ne.s32.totalorder %s56, %s59
      %p65 = scmp.eq.s32.totalorder %s19, 0
      %p66 = por %p64, %p65
      %p67 = scmp.ne.s32.totalorder %s56, %s59
      %p68 = scmp.eq.s32.totalorder %s24, 4
      %p69 = por %p67, %p68
      %p70 = scmp.ne.s32.totalorder %s59, %s60
      %p71 = scmp.eq.s32.totalorder %s24, 0
      %p72 = por %p70, %p71
      %p73 = scmp.ne.s32.totalorder %s59, %s60
      %p74 = scmp.eq.s32.totalorder %s25, 4
      %p75 = por %p73, %p74
      %p77 = scmp.ne.s32.totalorder %s60, %s76
      %p78 = scmp.eq.s32.totalorder %s25, 0
      %p79 = por %p77, %p78
      %s81 = sadd.s32 %s80, 1
      %p84 = scmp.eq.s32.totalorder %s19, 4
      %p85 = scmp.ne.s32.totalorder %s80, %s82
      %p86 = scmp.eq.s32.totalorder %s19, 0
      %p87 = por %p85, %p86
      %p88 = scmp.ne.s32.totalorder %s80, %s82
      %p89 = scmp.eq.s32.totalorder %s24, 4
      %p90 = por %p88, %p89
      %p91 = scmp.ne.s32.totalorder %s82, %s83
      %p92 = scmp.eq.s32.totalorder %s24, 0
      %p93 = por %p91, %p92
      %p94 = scmp.ne.s32.totalorder %s82, %s83
      %p95 = scmp.eq.s32.totalorder %s25, 4
      %p96 = por %p94, %p95
      %p98 = scmp.ne.s32.totalorder %s83, %s97
      %p99 = scmp.eq.s32.totalorder %s25, 0
      %p100 = por %p98, %p99
      %s102 = sadd.s32 %s101, 1
      %p105 = scmp.eq.s32.totalorder %s19, 4
      %p106 = scmp.ne.s32.totalorder %s101, %s103
      %p107 = scmp.eq.s32.totalorder %s19, 0
      %p108 = por %p106, %p107
      %p109 = scmp.ne.s32.totalorder %s101, %s103
      %p110 = scmp.eq.s32.totalorder %s24, 4
      %p111 = por %p109, %p110
      %p112 = scmp.ne.s32.totalorder %s103, %s104
      %p113 = scmp.eq.s32.totalorder %s24, 0
      %p114 = por %p112, %p113
      %p115 = scmp.ne.s32.totalorder %s103, %s104
      %p116 = scmp.eq.s32.totalorder %s25, 4
      %p117 = por %p115, %p116
      %p119 = scmp.ne.s32.totalorder %s104, %s118
      %p120 = scmp.eq.s32.totalorder %s25, 0
      %p121 = por %p119, %p120
      %s123 = sadd.s32 %s122, 1
      %p126 = scmp.eq.s32.totalorder %s19, 4
      %p127 = scmp.ne.s32.totalorder %s122, %s124
      %p128 = scmp.eq.s32.totalorder %s19, 0
      %p129 = por %p127, %p128
      %p130 = scmp.ne.s32.totalorder %s122, %s124
      %p131 = scmp.eq.s32.totalorder %s24, 4
      %p132 = por %p130, %p131
      %p133 = scmp.ne.s32.totalorder %s124, %s125
      %p134 = scmp.eq.s32.totalorder %s24, 0
      %p135 = por %p133, %p134
      %p136 = scmp.ne.s32.totalorder %s124, %s125
      %p137 = scmp.eq.s32.totalorder %s25, 4
      %p138 = por %p136, %p137
      %p140 = scmp.ne.s32.totalorder %s125, %s139
      %p141 = scmp.eq.s32.totalorder %s25, 0
      %p142 = por %p140, %p141
      %s143 = ssub.s32 %s27, %s41
      %p144 = scmp.eq.s32.totalorder %s143, 0
      %s146 = sadd.s32 %s145, 1
      %s147 = scalar_select %p144, %s145, %s146
      %p150 = pneg %p144
      %p151 = scmp.eq.s32.totalorder %s19, 4
      %p152 = por %p150, %p151
      %p153 = scmp.ne.s32.totalorder %s145, %s148
      %p154 = scmp.eq.s32.totalorder %s19, 0
      %p155 = por %p153, %p154
      %p156 = scmp.ne.s32.totalorder %s145, %s148
      %p157 = scmp.eq.s32.totalorder %s24, 4
      %p158 = por %p156, %p157
      %p159 = scmp.ne.s32.totalorder %s148, %s149
      %p160 = scmp.eq.s32.totalorder %s24, 0
      %p161 = por %p159, %p160
      %p162 = scmp.ne.s32.totalorder %s148, %s149
      %p163 = scmp.eq.s32.totalorder %s25, 4
      %p164 = por %p162, %p163
      %p166 = scmp.ne.s32.totalorder %s149, %s165
      %p167 = scmp.eq.s32.totalorder %s25, 0
      %p168 = por %p166, %p167
      %s169 = ssub.s32 %s27, %s41
      %p170 = scmp.eq.s32.totalorder %s169, 0
      %s172 = sadd.s32 %s171, 1
      %s173 = scalar_select %p170, %s171, %s172
      %p176 = pneg %p170
      %p177 = scmp.eq.s32.totalorder %s19, 4
      %p178 = por %p176, %p177
      %p179 = scmp.ne.s32.totalorder %s171, %s174
      %p180 = scmp.eq.s32.totalorder %s19, 0
      %p181 = por %p179, %p180
      %p182 = scmp.ne.s32.totalorder %s171, %s174
      %p183 = scmp.eq.s32.totalorder %s24, 4
      %p184 = por %p182, %p183
      %p185 = scmp.ne.s32.totalorder %s174, %s175
      %p186 = scmp.eq.s32.totalorder %s24, 0
      %p187 = por %p185, %p186
      %p188 = scmp.ne.s32.totalorder %s174, %s175
      %p189 = scmp.eq.s32.totalorder %s25, 4
      %p190 = por %p188, %p189
      %p192 = scmp.ne.s32.totalorder %s175, %s191
      %p193 = scmp.eq.s32.totalorder %s25, 0
      %p194 = por %p192, %p193
      %s196 = sadd.s32 %s195, 1
      %p199 = scmp.eq.s32.totalorder %s19, 4
      %p200 = scmp.ne.s32.totalorder %s195, %s197
      %p201 = scmp.eq.s32.totalorder %s19, 0
      %p202 = por %p200, %p201
      %p203 = scmp.ne.s32.totalorder %s195, %s197
      %p204 = scmp.eq.s32.totalorder %s24, 4
      %p205 = por %p203, %p204
      %p206 = scmp.ne.s32.totalorder %s197, %s198
      %p207 = scmp.eq.s32.totalorder %s24, 0
      %p208 = por %p206, %p207
      %p209 = scmp.ne.s32.totalorder %s197, %s198
      %p210 = scmp.eq.s32.totalorder %s25, 4
      %p211 = por %p209, %p210
      %p213 = scmp.ne.s32.totalorder %s198, %s212
      %p214 = scmp.eq.s32.totalorder %s25, 0
      %p215 = por %p213, %p214
      %p216 = scmp.le.s32.totalorder 1, %s19
      %p217 = scmp.lt.s32.totalorder %s19, 6
      %p218 = pnand %p216, %p217
      %p219 = pneg %p218
      // Predicated region
      $region9: #{tpu_custom_call.1} parent=5 // pred_check
        _
      $region10: #{tpu_custom_call.1} parent=5 // pred_check_branch
        %221 = sbr.rel (%p218) target = $region12
      $region11: #{tpu_custom_call.1} parent=5 // pred_region
        %s222 = ssub.s32 %s19, 1
        // Predicated region
        $region13: #{tpu_custom_call.1} parent=11 // pred_check
          %p223 = pneg %p93
        $region14: #{tpu_custom_call.1} parent=11 // pred_check_branch
          %225 = sbr.rel (%p223) target = $region16
        $region15: #{tpu_custom_call.1} parent=11 // pred_region
          %227 = vsyncadd [#allocation11], 0
          %s228 = sshll.u32 %s2, 4
          %s229 = int_to_ptr.hbm [resolvable:$true] %s228
          %s230 = sshll.u32 [#allocation10], 4
          %s231 = int_to_ptr.vmem [resolvable:$true] %s230
          %236 = dma.hbm_to_vmem [thread:$0]  %s229, 12288, %s231, [#allocation11], 128, 128, 8
        $region16: #{tpu_custom_call.1} parent=11 // pred_fallthru
          _
        // Predicated region
        $region17: #{tpu_custom_call.1} parent=11 // pred_check
          %p237 = pneg %p114
        $region18: #{tpu_custom_call.1} parent=11 // pred_check_branch
          %239 = sbr.rel (%p237) target = $region20
        $region19: #{tpu_custom_call.1} parent=11 // pred_region
          %241 = vsyncadd [#allocation11], 0
          %s242 = sshll.u32 %s3, 4
          %s243 = int_to_ptr.hbm [resolvable:$true] %s242
          %s244 = sshll.u32 [#allocation12], 4
          %s245 = int_to_ptr.vmem [resolvable:$true] %s244
          %250 = dma.hbm_to_vmem [thread:$0]  %s243, 12288, %s245, [#allocation11], 128, 128, 8
        $region20: #{tpu_custom_call.1} parent=11 // pred_fallthru
          _
        // Predicated region
        $region21: #{tpu_custom_call.1} parent=11 // pred_check
          %p251 = pneg %p135
        $region22: #{tpu_custom_call.1} parent=11 // pred_check_branch
          %253 = sbr.rel (%p251) target = $region24
        $region23: #{tpu_custom_call.1} parent=11 // pred_region
          %255 = vsyncadd [#allocation14], 0
          %s256 = sshll.u32 %s4, 4
          %s257 = int_to_ptr.hbm [resolvable:$true] %s256
          %s258 = sshll.u32 [#allocation13], 4
          %s259 = int_to_ptr.vmem [resolvable:$true] %s258
          %264 = dma.hbm_to_vmem [thread:$0]  %s257, 96, %s259, [#allocation14], 16, 16, 1
        $region24: #{tpu_custom_call.1} parent=11 // pred_fallthru
          _
        // Predicated region
        $region25: #{tpu_custom_call.1} parent=11 // pred_check
          %p265 = pneg %p161
        $region26: #{tpu_custom_call.1} parent=11 // pred_check_branch
          %267 = sbr.rel (%p265) target = $region28
        $region27: #{tpu_custom_call.1} parent=11 // pred_region
          %p268 = scmp.lt.s32.totalorder %s30, 0
          %s269 = scalar_select %p268, %s30, 0
          %s270 = smul.addr %s269, 4
          %s271 = scalar_lea.vmem %s5, %s270
        $region28: #{tpu_custom_call.1} parent=11 // pred_fallthru
          _
        // Predicated region
        $region29: #{tpu_custom_call.1} parent=11 // pred_check
          %p272 = pneg %p187
        $region30: #{tpu_custom_call.1} parent=11 // pred_check_branch
          %274 = sbr.rel (%p272) target = $region32
        $region31: #{tpu_custom_call.1} parent=11 // pred_region
          %276 = vsyncadd [#allocation14], 0
          %s277 = smul.addr %s30, 4
          %s278 = scalar_lea.hbm %s6, %s277
          %s280 = sshll.u32 %s278, 4
          %s281 = int_to_ptr.hbm [resolvable:$true] %s280
          %s282 = sshll.u32 [#allocation15], 4
          %s283 = int_to_ptr.vmem [resolvable:$true] %s282
          %285 = dma.hbm_to_vmem [thread:$0]  %s281, 64, %s283, [#allocation14]
        $region32: #{tpu_custom_call.1} parent=11 // pred_fallthru
          _
      $region12: #{tpu_custom_call.1} parent=5 // pred_fallthru
        _
      %p286 = scmp.lt.s32.totalorder %s19, 5
      // Predicated region
      $region33: #{tpu_custom_call.1} parent=5 // pred_check
        %p287 = pneg %p286
      $region34: #{tpu_custom_call.1} parent=5 // pred_check_branch
        %289 = sbr.rel (%p287) target = $region36
      $region35: #{tpu_custom_call.1} parent=5 // pred_region
        // Predicated region
        $region37: #{tpu_custom_call.1} parent=35 // pred_check
          %p290 = pneg %p66
        $region38: #{tpu_custom_call.1} parent=35 // pred_check_branch
          %292 = sbr.rel (%p290) target = $region40
        $region39: #{tpu_custom_call.1} parent=35 // pred_region
          %s293 = sand.u32 %s56, 1
          %s294 = scalar_lea.sflag [#allocation8], %s293
          %s295 = sand.u32 %s56, 1
          %s296 = smul.addr %s295, 64
          %s297 = scalar_lea.vmem [#allocation7], %s296
          %p298 = scmp.eq.s32.totalorder %s26, 0
          %s299 = scalar_select %p298, %s27, 0
          %s300 = scalar_select %p298, %s28, 0
          %s301 = smul.u32 16, %s299
          %303 = vsyncadd %s294, 0
          %s304 = sadd.s32 %s300, %s301
          %s305 = smul.addr %s304, 4
          %s306 = scalar_lea.hbm %s0, %s305
          %s307 = sshll.u32 %s306, 4
          %s308 = int_to_ptr.hbm [resolvable:$true] %s307
          %s309 = sshll.u32 %s297, 4
          %s310 = int_to_ptr.vmem [resolvable:$true] %s309
          %315 = dma.hbm_to_vmem [thread:$0]  %s308, 1024, %s310, %s294, 64, 64, 4
        $region40: #{tpu_custom_call.1} parent=35 // pred_fallthru
          _
      $region36: #{tpu_custom_call.1} parent=5 // pred_fallthru
        _
      %p316 = scmp.le.s32.totalorder 1, %s19
      %p317 = scmp.lt.s32.totalorder %s19, 6
      %p318 = pnand %p316, %p317
      %p319 = pneg %p318
      // Predicated region
      $region41: #{tpu_custom_call.1} parent=5 // pred_check
        _
      $region42: #{tpu_custom_call.1} parent=5 // pred_check_branch
        %321 = sbr.rel (%p318) target = $region44
      $region43: #{tpu_custom_call.1} parent=5 // pred_region
        %s322 = ssub.s32 %s19, 1
        %s323 = sand.u32 %s59, 1
        %s324 = scalar_lea.sflag [#allocation8], %s323
        %s325 = sand.u32 %s59, 1
        %s326 = smul.addr %s325, 64
        %s327 = scalar_lea.vmem [#allocation7], %s326
        // Predicated region
        $region45: #{tpu_custom_call.1} parent=43 // pred_check
          %p328 = pneg %p72
        $region46: #{tpu_custom_call.1} parent=43 // pred_check_branch
          %330 = sbr.rel (%p328) target = $region48
        $region47: #{tpu_custom_call.1} parent=43 // pred_region
          %332 = dma.done %s324, 1024
        $region48: #{tpu_custom_call.1} parent=43 // pred_fallthru
          _
        // Predicated region
        $region49: #{tpu_custom_call.1} parent=43 // pred_check
          %p333 = pneg %p93
        $region50: #{tpu_custom_call.1} parent=43 // pred_check_branch
          %335 = sbr.rel (%p333) target = $region52
        $region51: #{tpu_custom_call.1} parent=43 // pred_region
          %337 = dma.done [#allocation11], 12288
        $region52: #{tpu_custom_call.1} parent=43 // pred_fallthru
          _
        // Predicated region
        $region53: #{tpu_custom_call.1} parent=43 // pred_check
          %p338 = pneg %p114
        $region54: #{tpu_custom_call.1} parent=43 // pred_check_branch
          %340 = sbr.rel (%p338) target = $region56
        $region55: #{tpu_custom_call.1} parent=43 // pred_region
          %342 = dma.done [#allocation11], 12288
        $region56: #{tpu_custom_call.1} parent=43 // pred_fallthru
          _
        // Predicated region
        $region57: #{tpu_custom_call.1} parent=43 // pred_check
          %p343 = pneg %p135
        $region58: #{tpu_custom_call.1} parent=43 // pred_check_branch
          %345 = sbr.rel (%p343) target = $region60
        $region59: #{tpu_custom_call.1} parent=43 // pred_region
          %347 = dma.done [#allocation14], 96
        $region60: #{tpu_custom_call.1} parent=43 // pred_fallthru
          _
        // Predicated region
        $region61: #{tpu_custom_call.1} parent=43 // pred_check
          %p348 = pneg %p187
        $region62: #{tpu_custom_call.1} parent=43 // pred_check_branch
          %350 = sbr.rel (%p348) target = $region64
        $region63: #{tpu_custom_call.1} parent=43 // pred_region
          %352 = dma.done [#allocation14], 64
        $region64: #{tpu_custom_call.1} parent=43 // pred_fallthru
          _
        %s353 = sand.u32 %s59, 1
        %s354 = scalar_lea.sflag [#allocation8], %s353
        %s355 = sand.u32 %s59, 1
        %s356 = smul.addr %s355, 64
        %s357 = scalar_lea.vmem [#allocation7], %s356
        %p358 = pneg %p72
        %p359 = pneg %p69
        %p360 = pneg %p93
        %p361 = pneg %p90
        %p362 = pneg %p114
        %p363 = pneg %p111
        %p364 = pneg %p135
        %p365 = pneg %p132
        %p366 = scmp.lt.s32.totalorder %s30, 0
        %s367 = scalar_select %p366, %s30, 0
        %s368 = smul.addr %s367, 4
        %s369 = scalar_lea.vmem %s5, %s368
        %p370 = pneg %p161
        %p371 = pneg %p158
        %p372 = pneg %p187
        %p373 = pneg %p184
        %p374 = pneg %p208
        %p375 = pneg %p205
        %p376 = scmp.eq.s32.totalorder %s29, 0
        %s377 = scalar_select %p376, %s30, 0
        %s378 = scalar_select %p376, %s31, 0
        %s379 = smul.u32 16, %s377
        %p380 = scmp.lt.s32.totalorder %s30, 0
        %s381 = scalar_select %p380, %s30, 0
        %s382 = smul.addr %s381, 4
        %s383 = scalar_lea.vmem %s5, %s382
        %s384 = smul.u32 %s30, 128
        %s385 = smul.u32 %s31, 128
        %p386 = scmp.eq.s32.totalorder %s29, 0
        %p387 = scmp.eq.s32.totalorder %s30, 0
        %p388 = pnand %p386, %p387
        %p389 = pneg %p388
        %p390 = scmp.eq.s32.totalorder %s31, 0
        %p391 = pnand %p389, %p390
        %p392 = pneg %p391
        // Predicated region
        $region65: #{tpu_custom_call.1} parent=43 // pred_check
          _
        $region66: #{tpu_custom_call.1} parent=43 // pred_check_branch
          %394 = sbr.rel (%p391) target = $region68
        $region67: #{tpu_custom_call.1} parent=43 // pred_region
          $region69: #{tpu_custom_call.1} parent=67
            #allocation17 [shape = 's32[1]{0}', space=sflag, size = 0x4, scoped, tag = 'scoped memory for tpu_custom_call.1']
            // Predicated region
            $region70: #{tpu_custom_call.1} parent=69 // pred_check
              _
            $region71: #{tpu_custom_call.1} parent=69 // pred_check_branch
              %396 = sbr.rel target = $region73
            $region72: #{tpu_custom_call.1} parent=69 // pred_region
              %397 = sst [smem:[#allocation20]] [#allocation19]
              %398 = sst [smem:[#allocation21]] [#allocation18]
            $region73: #{tpu_custom_call.1} parent=69 // pred_fallthru
              _
            %400 = shalt.err (0)
            %s402 = sshll.u32 %s1, 4
            %s403 = int_to_ptr.hbm [resolvable:$true] %s402
            %s404 = sshll.u32 [#allocation2], 4
            %s405 = int_to_ptr.vmem [resolvable:$true] %s404
            %407 = dma.hbm_to_vmem [thread:$0]  %s403, 1024, %s405, [#allocation17]
            %s408 = smul.u32 4, 16
            %s409 = smul.u32 %s408, 1
            %s410 = sshll.u32 %s409, 4
            %411 = dma.done [#allocation17], %s410
        $region68: #{tpu_custom_call.1} parent=43 // pred_fallthru
          _
        %p412 = scmp.lt.s32.totalorder %s29, 0
        %s413 = ssub.s32 0, %s29
        %s414 = scalar_select %p412, %s413, %s29
        %s415 = sand.u32 %s414, 1
        %s416 = ssub.s32 0, %s415
        %s417 = scalar_select %p412, %s416, %s415
        %p418 = scmp.ne.s32.totalorder %s417, 0
        %p419 = scmp.lt.s32.totalorder %s417, 0
        %p420 = pnand %p419, %p418
        %p421 = pneg %p420
        %s422 = sadd.s32 %s417, 2
        %s423 = scalar_select %p421, %s422, %s417
        %s424 = ssub.s32 1, %s423
        // Predicated region
        $region74: #{tpu_custom_call.1} parent=43 // pred_check
          %p425 = pneg %p386
        $region75: #{tpu_custom_call.1} parent=43 // pred_check_branch
          %427 = sbr.rel (%p425) target = $region77
        $region76: #{tpu_custom_call.1} parent=43 // pred_region
          %v428 = vld [vmem:[%s327] sm:$0xf]
          %v429 = vld [vmem:[%s327 + $0x4] sm:$0xf]
          %v430 = vld [vmem:[%s327 + $0x8] sm:$0xf]
          %v431 = vld [vmem:[%s327 + $0xc] sm:$0xf]
          %v432 = vld [vmem:[%s327 + $0x10] sm:$0xf]
          %v433 = vld [vmem:[%s327 + $0x14] sm:$0xf]
          %v434 = vld [vmem:[%s327 + $0x18] sm:$0xf]
          %v435 = vld [vmem:[%s327 + $0x1c] sm:$0xf]
          %v436 = vld [vmem:[%s327 + $0x20] sm:$0xf]
          %v437 = vld [vmem:[%s327 + $0x24] sm:$0xf]
          %v438 = vld [vmem:[%s327 + $0x28] sm:$0xf]
          %v439 = vld [vmem:[%s327 + $0x2c] sm:$0xf]
          %v440 = vld [vmem:[%s327 + $0x30] sm:$0xf]
          %v441 = vld [vmem:[%s327 + $0x34] sm:$0xf]
          %v442 = vld [vmem:[%s327 + $0x38] sm:$0xf]
          %v443 = vld [vmem:[%s327 + $0x3c] sm:$0xf]
          %s444 = sshra.s32 %s385, 7
          %s445 = sand.u32 %s385, 127
          %s446 = sshra.s32 %s384, 3
          %s447 = sand.u32 %s384, 7
          %s448 = sadd.s32 %s444, %s446
          %s449 = smul.addr %s448, 4
          %s450 = scalar_lea.vmem [#allocation6], %s449
          %451 = vst [vmem:[%s450] sm:$0xf] %v428
          %452 = vst [vmem:[%s450 + $0x4] sm:$0xf] %v429
          %453 = vst [vmem:[%s450 + $0x8] sm:$0xf] %v430
          %454 = vst [vmem:[%s450 + $0xc] sm:$0xf] %v431
          %455 = vst [vmem:[%s450 + $0x10] sm:$0xf] %v432
          %456 = vst [vmem:[%s450 + $0x14] sm:$0xf] %v433
          %457 = vst [vmem:[%s450 + $0x18] sm:$0xf] %v434
          %458 = vst [vmem:[%s450 + $0x1c] sm:$0xf] %v435
          %459 = vst [vmem:[%s450 + $0x20] sm:$0xf] %v436
          %460 = vst [vmem:[%s450 + $0x24] sm:$0xf] %v437
          %461 = vst [vmem:[%s450 + $0x28] sm:$0xf] %v438
          %462 = vst [vmem:[%s450 + $0x2c] sm:$0xf] %v439
          %463 = vst [vmem:[%s450 + $0x30] sm:$0xf] %v440
          %464 = vst [vmem:[%s450 + $0x34] sm:$0xf] %v441
          %465 = vst [vmem:[%s450 + $0x38] sm:$0xf] %v442
          %466 = vst [vmem:[%s450 + $0x3c] sm:$0xf] %v443
        $region77: #{tpu_custom_call.1} parent=43 // pred_fallthru
          _
        %s467 = sshra.s32 %s385, 7
        %s468 = sand.u32 %s385, 127
        %s469 = sshra.s32 %s384, 3
        %s470 = sand.u32 %s384, 7
        %s471 = sadd.s32 %s467, %s469
        %s472 = smul.addr %s471, 4
        %s473 = scalar_lea.vmem [#allocation6], %s472
        %v474 = vld [vmem:[%s473] sm:$0xf]
        %v475 = vld [vmem:[%s473 + $0x4] sm:$0xf]
        %v476 = vld [vmem:[%s473 + $0x8] sm:$0xf]
        %v477 = vld [vmem:[%s473 + $0xc] sm:$0xf]
        %v478 = vld [vmem:[%s473 + $0x10] sm:$0xf]
        %v479 = vld [vmem:[%s473 + $0x14] sm:$0xf]
        %v480 = vld [vmem:[%s473 + $0x18] sm:$0xf]
        %v481 = vld [vmem:[%s473 + $0x1c] sm:$0xf]
        %v482 = vld [vmem:[%s473 + $0x20] sm:$0xf]
        %v483 = vld [vmem:[%s473 + $0x24] sm:$0xf]
        %v484 = vld [vmem:[%s473 + $0x28] sm:$0xf]
        %v485 = vld [vmem:[%s473 + $0x2c] sm:$0xf]
        %v486 = vld [vmem:[%s473 + $0x30] sm:$0xf]
        %v487 = vld [vmem:[%s473 + $0x34] sm:$0xf]
        %v488 = vld [vmem:[%s473 + $0x38] sm:$0xf]
        %v489 = vld [vmem:[%s473 + $0x3c] sm:$0xf]
        %s490 = sshra.s32 %s385, 3
        %s491 = sand.u32 %s385, 7
        %s492 = smul.u32 %s423, 16
        %s493 = sadd.s32 %s490, %s492
        %s494 = smul.addr %s493, 4
        %s495 = scalar_lea.vmem [#allocation2], %s494
        %v496 = vld [vmem:[%s495] sm:$0xf]
        %v497 = vld [vmem:[%s495 + $0x4] sm:$0xf]
        %v498 = vld [vmem:[%s495 + $0x8] sm:$0xf]
        %v499 = vld [vmem:[%s495 + $0xc] sm:$0xf]
        %v500 = vld [vmem:[%s495 + $0x10] sm:$0xf]
        %v501 = vld [vmem:[%s495 + $0x14] sm:$0xf]
        %v502 = vld [vmem:[%s495 + $0x18] sm:$0xf]
        %v503 = vld [vmem:[%s495 + $0x1c] sm:$0xf]
        %v504 = vld [vmem:[%s495 + $0x20] sm:$0xf]
        %v505 = vld [vmem:[%s495 + $0x24] sm:$0xf]
        %v506 = vld [vmem:[%s495 + $0x28] sm:$0xf]
        %v507 = vld [vmem:[%s495 + $0x2c] sm:$0xf]
        %v508 = vld [vmem:[%s495 + $0x30] sm:$0xf]
        %v509 = vld [vmem:[%s495 + $0x34] sm:$0xf]
        %v510 = vld [vmem:[%s495 + $0x38] sm:$0xf]
        %v511 = vld [vmem:[%s495 + $0x3c] sm:$0xf]
        %v528 = vunpack.c.l.b16 %v474
        %v529 = vunpack.c.l.b16 %v475
        %v530 = vunpack.c.l.b16 %v476
        %v531 = vunpack.c.l.b16 %v477
        %v532 = vunpack.c.l.b16 %v478
        %v533 = vunpack.c.l.b16 %v479
        %v534 = vunpack.c.l.b16 %v480
        %v535 = vunpack.c.l.b16 %v481
        %v536 = vunpack.c.l.b16 %v482
        %v537 = vunpack.c.l.b16 %v483
        %v538 = vunpack.c.l.b16 %v484
        %v539 = vunpack.c.l.b16 %v485
        %v540 = vunpack.c.l.b16 %v486
        %v541 = vunpack.c.l.b16 %v487
        %v542 = vunpack.c.l.b16 %v488
        %v543 = vunpack.c.l.b16 %v489
        %v544 = vpack.c.b16 %v529, %v528
        %v545 = vpack.c.b16 %v531, %v530
        %v546 = vpack.c.b16 %v533, %v532
        %v547 = vpack.c.b16 %v535, %v534
        %v548 = vpack.c.b16 %v537, %v536
        %v549 = vpack.c.b16 %v539, %v538
        %v550 = vpack.c.b16 %v541, %v540
        %v551 = vpack.c.b16 %v543, %v542
        %v576 = vunpack.c.l.b16 %v496
        %v577 = vunpack.c.l.b16 %v497
        %v578 = vunpack.c.l.b16 %v498
        %v579 = vunpack.c.l.b16 %v499
        %v580 = vunpack.c.l.b16 %v500
        %v581 = vunpack.c.l.b16 %v501
        %v582 = vunpack.c.l.b16 %v502
        %v583 = vunpack.c.l.b16 %v503
        %v584 = vunpack.c.l.b16 %v504
        %v585 = vunpack.c.l.b16 %v505
        %v586 = vunpack.c.l.b16 %v506
        %v587 = vunpack.c.l.b16 %v507
        %v588 = vunpack.c.l.b16 %v508
        %v589 = vunpack.c.l.b16 %v509
        %v590 = vunpack.c.l.b16 %v510
        %v591 = vunpack.c.l.b16 %v511
        %v592 = vpack.c.b16 %v577, %v576
        %v593 = vpack.c.b16 %v579, %v578
        %v594 = vpack.c.b16 %v581, %v580
        %v595 = vpack.c.b16 %v583, %v582
        %v596 = vpack.c.b16 %v585, %v584
        %v597 = vpack.c.b16 %v587, %v586
        %v598 = vpack.c.b16 %v589, %v588
        %v599 = vpack.c.b16 %v591, %v590
        %608 = vmatpush.bf16.msra.mxu0 %v599
        %609 = vmatpush.bf16.msra.mxu0 %v598
        %610 = vmatpush.bf16.msra.mxu0 %v597
        %611 = vmatpush.bf16.msra.mxu0 %v596
        %612 = vmatpush.bf16.msra.mxu0 %v595
        %613 = vmatpush.bf16.msra.mxu0 %v594
        %614 = vmatpush.bf16.msra.mxu0 %v593
        %615 = vmatpush.bf16.msra.mxu0 %v592
        %616 = vmatmul.bf16.gmra.mxu0 %v544
        %v617 = vpop.f32.mrf.mxu0
        %v618 = vadd.f32 0.0, %v617
        %v619 = vpop.f32.mrf.mxu0
        %v620 = vadd.f32 0.0, %v619
        %621 = vmatmul.bf16.gmra.mxu0 %v545
        %v622 = vpop.f32.mrf.mxu0
        %v623 = vadd.f32 0.0, %v622
        %v624 = vpop.f32.mrf.mxu0
        %v625 = vadd.f32 0.0, %v624
        %626 = vmatmul.bf16.gmra.mxu0 %v546
        %v627 = vpop.f32.mrf.mxu0
        %v628 = vadd.f32 0.0, %v627
        %v629 = vpop.f32.mrf.mxu0
        %v630 = vadd.f32 0.0, %v629
        %631 = vmatmul.bf16.gmra.mxu0 %v547
        %v632 = vpop.f32.mrf.mxu0
        %v633 = vadd.f32 0.0, %v632
        %v634 = vpop.f32.mrf.mxu0
        %v635 = vadd.f32 0.0, %v634
        %636 = vmatmul.bf16.gmra.mxu0 %v548
        %v637 = vpop.f32.mrf.mxu0
        %v638 = vadd.f32 0.0, %v637
        %v639 = vpop.f32.mrf.mxu0
        %v640 = vadd.f32 0.0, %v639
        %641 = vmatmul.bf16.gmra.mxu0 %v549
        %v642 = vpop.f32.mrf.mxu0
        %v643 = vadd.f32 0.0, %v642
        %v644 = vpop.f32.mrf.mxu0
        %v645 = vadd.f32 0.0, %v644
        %646 = vmatmul.bf16.gmra.mxu0 %v550
        %v647 = vpop.f32.mrf.mxu0
        %v648 = vadd.f32 0.0, %v647
        %v649 = vpop.f32.mrf.mxu0
        %v650 = vadd.f32 0.0, %v649
        %651 = vmatmul.bf16.gmra.mxu0 %v551
        %v652 = vpop.f32.mrf.mxu0
        %v653 = vadd.f32 0.0, %v652
        %v654 = vpop.f32.mrf.mxu0
        %v655 = vadd.f32 0.0, %v654
        %656 = vdwg.mxu0
        // Predicated region
        $region78: #{tpu_custom_call.1} parent=43 // pred_check
          %p657 = pneg %p390
        $region79: #{tpu_custom_call.1} parent=43 // pred_check_branch
          %659 = sbr.rel (%p657) target = $region81
        $region80: #{tpu_custom_call.1} parent=43 // pred_region
          %660 = vst [vmem:[#allocation3] sm:$0xff] %v618
          %661 = vst [vmem:[#allocation3 + $0x8] sm:$0xff] %v620
          %662 = vst [vmem:[#allocation3 + $0x10] sm:$0xff] %v623
          %663 = vst [vmem:[#allocation3 + $0x18] sm:$0xff] %v625
          %664 = vst [vmem:[#allocation3 + $0x20] sm:$0xff] %v628
          %665 = vst [vmem:[#allocation3 + $0x28] sm:$0xff] %v630
          %666 = vst [vmem:[#allocation3 + $0x30] sm:$0xff] %v633
          %667 = vst [vmem:[#allocation3 + $0x38] sm:$0xff] %v635
          %668 = vst [vmem:[#allocation3 + $0x40] sm:$0xff] %v638
          %669 = vst [vmem:[#allocation3 + $0x48] sm:$0xff] %v640
          %670 = vst [vmem:[#allocation3 + $0x50] sm:$0xff] %v643
          %671 = vst [vmem:[#allocation3 + $0x58] sm:$0xff] %v645
          %672 = vst [vmem:[#allocation3 + $0x60] sm:$0xff] %v648
          %673 = vst [vmem:[#allocation3 + $0x68] sm:$0xff] %v650
          %674 = vst [vmem:[#allocation3 + $0x70] sm:$0xff] %v653
          %675 = vst [vmem:[#allocation3 + $0x78] sm:$0xff] %v655
        $region81: #{tpu_custom_call.1} parent=43 // pred_fallthru
          _
        %p676 = scmp.gt.s32.totalorder %s31, 0
        // Predicated region
        $region82: #{tpu_custom_call.1} parent=43 // pred_check
          %p677 = pneg %p676
        $region83: #{tpu_custom_call.1} parent=43 // pred_check_branch
          %679 = sbr.rel (%p677) target = $region85
        $region84: #{tpu_custom_call.1} parent=43 // pred_region
          %v680 = vld [vmem:[#allocation3] sm:$0xff]
          %v681 = vld [vmem:[#allocation3 + $0x8] sm:$0xff]
          %v682 = vld [vmem:[#allocation3 + $0x10] sm:$0xff]
          %v683 = vld [vmem:[#allocation3 + $0x18] sm:$0xff]
          %v684 = vld [vmem:[#allocation3 + $0x20] sm:$0xff]
          %v685 = vld [vmem:[#allocation3 + $0x28] sm:$0xff]
          %v686 = vld [vmem:[#allocation3 + $0x30] sm:$0xff]
          %v687 = vld [vmem:[#allocation3 + $0x38] sm:$0xff]
          %v688 = vld [vmem:[#allocation3 + $0x40] sm:$0xff]
          %v689 = vld [vmem:[#allocation3 + $0x48] sm:$0xff]
          %v690 = vld [vmem:[#allocation3 + $0x50] sm:$0xff]
          %v691 = vld [vmem:[#allocation3 + $0x58] sm:$0xff]
          %v692 = vld [vmem:[#allocation3 + $0x60] sm:$0xff]
          %v693 = vld [vmem:[#allocation3 + $0x68] sm:$0xff]
          %v694 = vld [vmem:[#allocation3 + $0x70] sm:$0xff]
          %v695 = vld [vmem:[#allocation3 + $0x78] sm:$0xff]
          %v696 = vadd.f32 %v680, %v618
          %v697 = vadd.f32 %v681, %v620
          %v698 = vadd.f32 %v682, %v623
          %v699 = vadd.f32 %v683, %v625
          %v700 = vadd.f32 %v684, %v628
          %v701 = vadd.f32 %v685, %v630
          %v702 = vadd.f32 %v686, %v633
          %v703 = vadd.f32 %v687, %v635
          %v704 = vadd.f32 %v688, %v638
          %v705 = vadd.f32 %v689, %v640
          %v706 = vadd.f32 %v690, %v643
          %v707 = vadd.f32 %v691, %v645
          %v708 = vadd.f32 %v692, %v648
          %v709 = vadd.f32 %v693, %v650
          %v710 = vadd.f32 %v694, %v653
          %v711 = vadd.f32 %v695, %v655
          %712 = vst [vmem:[#allocation3] sm:$0xff] %v696
          %713 = vst [vmem:[#allocation3 + $0x8] sm:$0xff] %v697
          %714 = vst [vmem:[#allocation3 + $0x10] sm:$0xff] %v698
          %715 = vst [vmem:[#allocation3 + $0x18] sm:$0xff] %v699
          %716 = vst [vmem:[#allocation3 + $0x20] sm:$0xff] %v700
          %717 = vst [vmem:[#allocation3 + $0x28] sm:$0xff] %v701
          %718 = vst [vmem:[#allocation3 + $0x30] sm:$0xff] %v702
          %719 = vst [vmem:[#allocation3 + $0x38] sm:$0xff] %v703
          %720 = vst [vmem:[#allocation3 + $0x40] sm:$0xff] %v704
          %721 = vst [vmem:[#allocation3 + $0x48] sm:$0xff] %v705
          %722 = vst [vmem:[#allocation3 + $0x50] sm:$0xff] %v706
          %723 = vst [vmem:[#allocation3 + $0x58] sm:$0xff] %v707
          %724 = vst [vmem:[#allocation3 + $0x60] sm:$0xff] %v708
          %725 = vst [vmem:[#allocation3 + $0x68] sm:$0xff] %v709
          %726 = vst [vmem:[#allocation3 + $0x70] sm:$0xff] %v710
          %727 = vst [vmem:[#allocation3 + $0x78] sm:$0xff] %v711
        $region85: #{tpu_custom_call.1} parent=43 // pred_fallthru
          _
        // Predicated region
        $region86: #{tpu_custom_call.1} parent=43 // pred_check
          %p728 = pneg %p390
        $region87: #{tpu_custom_call.1} parent=43 // pred_check_branch
          %730 = sbr.rel (%p728) target = $region89
        $region88: #{tpu_custom_call.1} parent=43 // pred_region
          %s731 = sadd.s32 %s469, %s492
          %s732 = smul.addr %s731, 4
          %s733 = scalar_lea.vmem [#allocation2], %s732
          %v734 = vld [vmem:[%s733] sm:$0xf]
          %v735 = vld [vmem:[%s733 + $0x4] sm:$0xf]
          %v736 = vld [vmem:[%s733 + $0x8] sm:$0xf]
          %v737 = vld [vmem:[%s733 + $0xc] sm:$0xf]
          %v738 = vld [vmem:[%s733 + $0x10] sm:$0xf]
          %v739 = vld [vmem:[%s733 + $0x14] sm:$0xf]
          %v740 = vld [vmem:[%s733 + $0x18] sm:$0xf]
          %v741 = vld [vmem:[%s733 + $0x1c] sm:$0xf]
          %v742 = vld [vmem:[%s733 + $0x20] sm:$0xf]
          %v743 = vld [vmem:[%s733 + $0x24] sm:$0xf]
          %v744 = vld [vmem:[%s733 + $0x28] sm:$0xf]
          %v745 = vld [vmem:[%s733 + $0x2c] sm:$0xf]
          %v746 = vld [vmem:[%s733 + $0x30] sm:$0xf]
          %v747 = vld [vmem:[%s733 + $0x34] sm:$0xf]
          %v748 = vld [vmem:[%s733 + $0x38] sm:$0xf]
          %v749 = vld [vmem:[%s733 + $0x3c] sm:$0xf]
          %v750 = vunpack.c.l.bf16 %v734
          %v751 = vunpack.c.l.bf16 %v735
          %v752 = vunpack.c.l.bf16 %v736
          %v753 = vunpack.c.l.bf16 %v737
          %v754 = vunpack.c.l.bf16 %v738
          %v755 = vunpack.c.l.bf16 %v739
          %v756 = vunpack.c.l.bf16 %v740
          %v757 = vunpack.c.l.bf16 %v741
          %v758 = vunpack.c.l.bf16 %v742
          %v759 = vunpack.c.l.bf16 %v743
          %v760 = vunpack.c.l.bf16 %v744
          %v761 = vunpack.c.l.bf16 %v745
          %v762 = vunpack.c.l.bf16 %v746
          %v763 = vunpack.c.l.bf16 %v747
          %v764 = vunpack.c.l.bf16 %v748
          %v765 = vunpack.c.l.bf16 %v749
          %v766 = vld [vmem:[#allocation3] sm:$0xff]
          %v767 = vld [vmem:[#allocation3 + $0x8] sm:$0xff]
          %v768 = vld [vmem:[#allocation3 + $0x10] sm:$0xff]
          %v769 = vld [vmem:[#allocation3 + $0x18] sm:$0xff]
          %v770 = vld [vmem:[#allocation3 + $0x20] sm:$0xff]
          %v771 = vld [vmem:[#allocation3 + $0x28] sm:$0xff]
          %v772 = vld [vmem:[#allocation3 + $0x30] sm:$0xff]
          %v773 = vld [vmem:[#allocation3 + $0x38] sm:$0xff]
          %v774 = vld [vmem:[#allocation3 + $0x40] sm:$0xff]
          %v775 = vld [vmem:[#allocation3 + $0x48] sm:$0xff]
          %v776 = vld [vmem:[#allocation3 + $0x50] sm:$0xff]
          %v777 = vld [vmem:[#allocation3 + $0x58] sm:$0xff]
          %v778 = vld [vmem:[#allocation3 + $0x60] sm:$0xff]
          %v779 = vld [vmem:[#allocation3 + $0x68] sm:$0xff]
          %v780 = vld [vmem:[#allocation3 + $0x70] sm:$0xff]
          %v781 = vld [vmem:[#allocation3 + $0x78] sm:$0xff]
          %s782 = smul.u32 %s29, 128
          %s783 = scalar_lea.vmem [#allocation10], %s782
          %v784 = vld [vmem:[%s783] sm:$0xff]
          %v785 = vld [vmem:[%s783 + $0x8] sm:$0xff]
          %v786 = vld [vmem:[%s783 + $0x10] sm:$0xff]
          %v787 = vld [vmem:[%s783 + $0x18] sm:$0xff]
          %v788 = vld [vmem:[%s783 + $0x20] sm:$0xff]
          %v789 = vld [vmem:[%s783 + $0x28] sm:$0xff]
          %v790 = vld [vmem:[%s783 + $0x30] sm:$0xff]
          %v791 = vld [vmem:[%s783 + $0x38] sm:$0xff]
          %v792 = vld [vmem:[%s783 + $0x40] sm:$0xff]
          %v793 = vld [vmem:[%s783 + $0x48] sm:$0xff]
          %v794 = vld [vmem:[%s783 + $0x50] sm:$0xff]
          %v795 = vld [vmem:[%s783 + $0x58] sm:$0xff]
          %v796 = vld [vmem:[%s783 + $0x60] sm:$0xff]
          %v797 = vld [vmem:[%s783 + $0x68] sm:$0xff]
          %v798 = vld [vmem:[%s783 + $0x70] sm:$0xff]
          %v799 = vld [vmem:[%s783 + $0x78] sm:$0xff]
          %s800 = scalar_lea.vmem [#allocation12], %s782
          %v801 = vld [vmem:[%s800] sm:$0xff]
          %v802 = vld [vmem:[%s800 + $0x8] sm:$0xff]
          %v803 = vld [vmem:[%s800 + $0x10] sm:$0xff]
          %v804 = vld [vmem:[%s800 + $0x18] sm:$0xff]
          %v805 = vld [vmem:[%s800 + $0x20] sm:$0xff]
          %v806 = vld [vmem:[%s800 + $0x28] sm:$0xff]
          %v807 = vld [vmem:[%s800 + $0x30] sm:$0xff]
          %v808 = vld [vmem:[%s800 + $0x38] sm:$0xff]
          %v809 = vld [vmem:[%s800 + $0x40] sm:$0xff]
          %v810 = vld [vmem:[%s800 + $0x48] sm:$0xff]
          %v811 = vld [vmem:[%s800 + $0x50] sm:$0xff]
          %v812 = vld [vmem:[%s800 + $0x58] sm:$0xff]
          %v813 = vld [vmem:[%s800 + $0x60] sm:$0xff]
          %v814 = vld [vmem:[%s800 + $0x68] sm:$0xff]
          %v815 = vld [vmem:[%s800 + $0x70] sm:$0xff]
          %v816 = vld [vmem:[%s800 + $0x78] sm:$0xff]
          %817 = vmatpush.msra.mxu0 %v816
          %818 = vmatpush.msra.mxu0 %v815
          %819 = vmatpush.msra.mxu0 %v814
          %820 = vmatpush.msra.mxu0 %v813
          %821 = vmatpush.msra.mxu0 %v812
          %822 = vmatpush.msra.mxu0 %v811
          %823 = vmatpush.msra.mxu0 %v810
          %824 = vmatpush.msra.mxu0 %v809
          %825 = vmatpush.msra.mxu0 %v808
          %826 = vmatpush.msra.mxu0 %v807
          %827 = vmatpush.msra.mxu0 %v806
          %828 = vmatpush.msra.mxu0 %v805
          %829 = vmatpush.msra.mxu0 %v804
          %830 = vmatpush.msra.mxu0 %v803
          %831 = vmatpush.msra.mxu0 %v802
          %832 = vmatpush.msra.mxu0 %v801
          %833 = vmatmul.f32.gmra.mxu0 %v750
          %v834 = vpop.f32.mrf.mxu0
          %v835 = vadd.f32 0.0, %v834
          %836 = vmatmul.f32.gmra.mxu0 %v751
          %v837 = vpop.f32.mrf.mxu0
          %v838 = vadd.f32 0.0, %v837
          %839 = vmatmul.f32.gmra.mxu0 %v752
          %v840 = vpop.f32.mrf.mxu0
          %v841 = vadd.f32 0.0, %v840
          %842 = vmatmul.f32.gmra.mxu0 %v753
          %v843 = vpop.f32.mrf.mxu0
          %v844 = vadd.f32 0.0, %v843
          %845 = vmatmul.f32.gmra.mxu0 %v754
          %v846 = vpop.f32.mrf.mxu0
          %v847 = vadd.f32 0.0, %v846
          %848 = vmatmul.f32.gmra.mxu0 %v755
          %v849 = vpop.f32.mrf.mxu0
          %v850 = vadd.f32 0.0, %v849
          %851 = vmatmul.f32.gmra.mxu0 %v756
          %v852 = vpop.f32.mrf.mxu0
          %v853 = vadd.f32 0.0, %v852
          %854 = vmatmul.f32.gmra.mxu0 %v757
          %v855 = vpop.f32.mrf.mxu0
          %v856 = vadd.f32 0.0, %v855
          %857 = vmatmul.f32.gmra.mxu0 %v758
          %v858 = vpop.f32.mrf.mxu0
          %v859 = vadd.f32 0.0, %v858
          %860 = vmatmul.f32.gmra.mxu0 %v759
          %v861 = vpop.f32.mrf.mxu0
          %v862 = vadd.f32 0.0, %v861
          %863 = vmatmul.f32.gmra.mxu0 %v760
          %v864 = vpop.f32.mrf.mxu0
          %v865 = vadd.f32 0.0, %v864
          %866 = vmatmul.f32.gmra.mxu0 %v761
          %v867 = vpop.f32.mrf.mxu0
          %v868 = vadd.f32 0.0, %v867
          %869 = vmatmul.f32.gmra.mxu0 %v762
          %v870 = vpop.f32.mrf.mxu0
          %v871 = vadd.f32 0.0, %v870
          %872 = vmatmul.f32.gmra.mxu0 %v763
          %v873 = vpop.f32.mrf.mxu0
          %v874 = vadd.f32 0.0, %v873
          %875 = vmatmul.f32.gmra.mxu0 %v764
          %v876 = vpop.f32.mrf.mxu0
          %v877 = vadd.f32 0.0, %v876
          %878 = vmatmul.f32.gmra.mxu0 %v765
          %v879 = vpop.f32.mrf.mxu0
          %v880 = vadd.f32 0.0, %v879
          %881 = vdwg.mxu0
          %882 = vmatpush.msra.mxu0 %v799
          %883 = vmatpush.msra.mxu0 %v798
          %884 = vmatpush.msra.mxu0 %v797
          %885 = vmatpush.msra.mxu0 %v796
          %886 = vmatpush.msra.mxu0 %v795
          %887 = vmatpush.msra.mxu0 %v794
          %888 = vmatpush.msra.mxu0 %v793
          %889 = vmatpush.msra.mxu0 %v792
          %890 = vmatpush.msra.mxu0 %v791
          %891 = vmatpush.msra.mxu0 %v790
          %892 = vmatpush.msra.mxu0 %v789
          %893 = vmatpush.msra.mxu0 %v788
          %894 = vmatpush.msra.mxu0 %v787
          %895 = vmatpush.msra.mxu0 %v786
          %896 = vmatpush.msra.mxu0 %v785
          %897 = vmatpush.msra.mxu0 %v784
          %898 = vmatmul.f32.gmra.mxu0 %v766
          %v899 = vpop.f32.mrf.mxu0
          %v900 = vadd.f32 %v835, %v899
          %901 = vmatmul.f32.gmra.mxu0 %v767
          %v902 = vpop.f32.mrf.mxu0
          %v903 = vadd.f32 %v838, %v902
          %904 = vmatmul.f32.gmra.mxu0 %v768
          %v905 = vpop.f32.mrf.mxu0
          %v906 = vadd.f32 %v841, %v905
          %907 = vmatmul.f32.gmra.mxu0 %v769
          %v908 = vpop.f32.mrf.mxu0
          %v909 = vadd.f32 %v844, %v908
          %910 = vmatmul.f32.gmra.mxu0 %v770
          %v911 = vpop.f32.mrf.mxu0
          %v912 = vadd.f32 %v847, %v911
          %913 = vmatmul.f32.gmra.mxu0 %v771
          %v914 = vpop.f32.mrf.mxu0
          %v915 = vadd.f32 %v850, %v914
          %916 = vmatmul.f32.gmra.mxu0 %v772
          %v917 = vpop.f32.mrf.mxu0
          %v918 = vadd.f32 %v853, %v917
          %919 = vmatmul.f32.gmra.mxu0 %v773
          %v920 = vpop.f32.mrf.mxu0
          %v921 = vadd.f32 %v856, %v920
          %922 = vmatmul.f32.gmra.mxu0 %v774
          %v923 = vpop.f32.mrf.mxu0
          %v924 = vadd.f32 %v859, %v923
          %925 = vmatmul.f32.gmra.mxu0 %v775
          %v926 = vpop.f32.mrf.mxu0
          %v927 = vadd.f32 %v862, %v926
          %928 = vmatmul.f32.gmra.mxu0 %v776
          %v929 = vpop.f32.mrf.mxu0
          %v930 = vadd.f32 %v865, %v929
          %931 = vmatmul.f32.gmra.mxu0 %v777
          %v932 = vpop.f32.mrf.mxu0
          %v933 = vadd.f32 %v868, %v932
          %934 = vmatmul.f32.gmra.mxu0 %v778
          %v935 = vpop.f32.mrf.mxu0
          %v936 = vadd.f32 %v871, %v935
          %937 = vmatmul.f32.gmra.mxu0 %v779
          %v938 = vpop.f32.mrf.mxu0
          %v939 = vadd.f32 %v874, %v938
          %940 = vmatmul.f32.gmra.mxu0 %v780
          %v941 = vpop.f32.mrf.mxu0
          %v942 = vadd.f32 %v877, %v941
          %943 = vmatmul.f32.gmra.mxu0 %v781
          %v944 = vpop.f32.mrf.mxu0
          %v945 = vadd.f32 %v880, %v944
          %946 = vdwg.mxu0
          %s947 = scalar_lea.vmem [#allocation13], %s29
          %v948 = vld [vmem:[%s947] sm:$0x1]
          %v950 = vperm.slane %v948, 0
          %v952 = vadd.f32 %v900, %v950
          %v953 = vadd.f32 %v903, %v950
          %v954 = vadd.f32 %v906, %v950
          %v955 = vadd.f32 %v909, %v950
          %v956 = vadd.f32 %v912, %v950
          %v957 = vadd.f32 %v915, %v950
          %v958 = vadd.f32 %v918, %v950
          %v959 = vadd.f32 %v921, %v950
          %v960 = vadd.f32 %v924, %v950
          %v961 = vadd.f32 %v927, %v950
          %v962 = vadd.f32 %v930, %v950
          %v963 = vadd.f32 %v933, %v950
          %v964 = vadd.f32 %v936, %v950
          %v965 = vadd.f32 %v939, %v950
          %v966 = vadd.f32 %v942, %v950
          %v967 = vadd.f32 %v945, %v950
          %v968 = vlaneseq
          %v969 = vshrl.u32 %v968, 7
          %v970 = vadd.s32 %v969, 8
          %v971 = vadd.s32 %v969, 16
          %v972 = vadd.s32 %v969, 24
          %v973 = vadd.s32 %v969, 32
          %v974 = vadd.s32 %v969, 40
          %v975 = vadd.s32 %v969, 48
          %v976 = vadd.s32 %v969, 56
          %v977 = vadd.s32 %v969, 64
          %v978 = vadd.s32 %v969, 72
          %v979 = vadd.s32 %v969, 80
          %v980 = vadd.s32 %v969, 88
          %v981 = vadd.s32 %v969, 96
          %v982 = vadd.s32 %v969, 104
          %v983 = vadd.s32 %v969, 112
          %v984 = vadd.s32 %v969, 120
          %v985 = vstv %s384
          %v986 = vadd.s32 %v985, %v969
          %v987 = vadd.s32 %v985, %v970
          %v988 = vadd.s32 %v985, %v971
          %v989 = vadd.s32 %v985, %v972
          %v990 = vadd.s32 %v985, %v973
          %v991 = vadd.s32 %v985, %v974
          %v992 = vadd.s32 %v985, %v975
          %v993 = vadd.s32 %v985, %v976
          %v994 = vadd.s32 %v985, %v977
          %v995 = vadd.s32 %v985, %v978
          %v996 = vadd.s32 %v985, %v979
          %v997 = vadd.s32 %v985, %v980
          %v998 = vadd.s32 %v985, %v981
          %v999 = vadd.s32 %v985, %v982
          %v1000 = vadd.s32 %v985, %v983
          %v1001 = vadd.s32 %v985, %v984
          %vm1002 = vcmp.lt.s32.totalorder %v986, 16
          %vm1003 = vcmp.lt.s32.totalorder %v987, 16
          %vm1004 = vcmp.lt.s32.totalorder %v988, 16
          %vm1005 = vcmp.lt.s32.totalorder %v989, 16
          %vm1006 = vcmp.lt.s32.totalorder %v990, 16
          %vm1007 = vcmp.lt.s32.totalorder %v991, 16
          %vm1008 = vcmp.lt.s32.totalorder %v992, 16
          %vm1009 = vcmp.lt.s32.totalorder %v993, 16
          %vm1010 = vcmp.lt.s32.totalorder %v994, 16
          %vm1011 = vcmp.lt.s32.totalorder %v995, 16
          %vm1012 = vcmp.lt.s32.totalorder %v996, 16
          %vm1013 = vcmp.lt.s32.totalorder %v997, 16
          %vm1014 = vcmp.lt.s32.totalorder %v998, 16
          %vm1015 = vcmp.lt.s32.totalorder %v999, 16
          %vm1016 = vcmp.lt.s32.totalorder %v1000, 16
          %vm1017 = vcmp.lt.s32.totalorder %v1001, 16
          %v1018 = vmax.f32 %v952, 0.0
          %v1019 = vmax.f32 %v953, 0.0
          %v1020 = vmax.f32 %v954, 0.0
          %v1021 = vmax.f32 %v955, 0.0
          %v1022 = vmax.f32 %v956, 0.0
          %v1023 = vmax.f32 %v957, 0.0
          %v1024 = vmax.f32 %v958, 0.0
          %v1025 = vmax.f32 %v959, 0.0
          %v1026 = vmax.f32 %v960, 0.0
          %v1027 = vmax.f32 %v961, 0.0
          %v1028 = vmax.f32 %v962, 0.0
          %v1029 = vmax.f32 %v963, 0.0
          %v1030 = vmax.f32 %v964, 0.0
          %v1031 = vmax.f32 %v965, 0.0
          %v1032 = vmax.f32 %v966, 0.0
          %v1033 = vmax.f32 %v967, 0.0
          %v1034 = vsel %vm1002, 1, 0
          %v1035 = vsel %vm1003, 1, 0
          %v1036 = vsel %vm1004, 1, 0
          %v1037 = vsel %vm1005, 1, 0
          %v1038 = vsel %vm1006, 1, 0
          %v1039 = vsel %vm1007, 1, 0
          %v1040 = vsel %vm1008, 1, 0
          %v1041 = vsel %vm1009, 1, 0
          %v1042 = vsel %vm1010, 1, 0
          %v1043 = vsel %vm1011, 1, 0
          %v1044 = vsel %vm1012, 1, 0
          %v1045 = vsel %vm1013, 1, 0
          %v1046 = vsel %vm1014, 1, 0
          %v1047 = vsel %vm1015, 1, 0
          %v1048 = vsel %vm1016, 1, 0
          %v1049 = vsel %vm1017, 1, 0
          %vm1050 = vcmp.eq.s32.totalorder %v1034, 1
          %vm1051 = vcmp.eq.s32.totalorder %v1035, 1
          %vm1052 = vcmp.eq.s32.totalorder %v1036, 1
          %vm1053 = vcmp.eq.s32.totalorder %v1037, 1
          %vm1054 = vcmp.eq.s32.totalorder %v1038, 1
          %vm1055 = vcmp.eq.s32.totalorder %v1039, 1
          %vm1056 = vcmp.eq.s32.totalorder %v1040, 1
          %vm1057 = vcmp.eq.s32.totalorder %v1041, 1
          %vm1058 = vcmp.eq.s32.totalorder %v1042, 1
          %vm1059 = vcmp.eq.s32.totalorder %v1043, 1
          %vm1060 = vcmp.eq.s32.totalorder %v1044, 1
          %vm1061 = vcmp.eq.s32.totalorder %v1045, 1
          %vm1062 = vcmp.eq.s32.totalorder %v1046, 1
          %vm1063 = vcmp.eq.s32.totalorder %v1047, 1
          %vm1064 = vcmp.eq.s32.totalorder %v1048, 1
          %vm1065 = vcmp.eq.s32.totalorder %v1049, 1
          %v1066 = vsel %vm1050, %v1018, 0.0
          %v1067 = vsel %vm1051, %v1019, 0.0
          %v1068 = vsel %vm1052, %v1020, 0.0
          %v1069 = vsel %vm1053, %v1021, 0.0
          %v1070 = vsel %vm1054, %v1022, 0.0
          %v1071 = vsel %vm1055, %v1023, 0.0
          %v1072 = vsel %vm1056, %v1024, 0.0
          %v1073 = vsel %vm1057, %v1025, 0.0
          %v1074 = vsel %vm1058, %v1026, 0.0
          %v1075 = vsel %vm1059, %v1027, 0.0
          %v1076 = vsel %vm1060, %v1028, 0.0
          %v1077 = vsel %vm1061, %v1029, 0.0
          %v1078 = vsel %vm1062, %v1030, 0.0
          %v1079 = vsel %vm1063, %v1031, 0.0
          %v1080 = vsel %vm1064, %v1032, 0.0
          %v1081 = vsel %vm1065, %v1033, 0.0
          %v1082 = vpack.c.bf16 %v1066, %v1066
          %v1083 = vpack.c.bf16 %v1067, %v1067
          %v1084 = vpack.c.bf16 %v1068, %v1068
          %v1085 = vpack.c.bf16 %v1069, %v1069
          %v1086 = vpack.c.bf16 %v1070, %v1070
          %v1087 = vpack.c.bf16 %v1071, %v1071
          %v1088 = vpack.c.bf16 %v1072, %v1072
          %v1089 = vpack.c.bf16 %v1073, %v1073
          %v1090 = vpack.c.bf16 %v1074, %v1074
          %v1091 = vpack.c.bf16 %v1075, %v1075
          %v1092 = vpack.c.bf16 %v1076, %v1076
          %v1093 = vpack.c.bf16 %v1077, %v1077
          %v1094 = vpack.c.bf16 %v1078, %v1078
          %v1095 = vpack.c.bf16 %v1079, %v1079
          %v1096 = vpack.c.bf16 %v1080, %v1080
          %v1097 = vpack.c.bf16 %v1081, %v1081
          %s1098 = smul.u32 %s424, 16
          %s1099 = sadd.s32 %s469, %s1098
          %s1100 = smul.addr %s1099, 4
          %s1101 = scalar_lea.vmem [#allocation2], %s1100
          %1102 = vst [vmem:[%s1101] sm:$0xf] %v1082
          %1103 = vst [vmem:[%s1101 + $0x4] sm:$0xf] %v1083
          %1104 = vst [vmem:[%s1101 + $0x8] sm:$0xf] %v1084
          %1105 = vst [vmem:[%s1101 + $0xc] sm:$0xf] %v1085
          %1106 = vst [vmem:[%s1101 + $0x10] sm:$0xf] %v1086
          %1107 = vst [vmem:[%s1101 + $0x14] sm:$0xf] %v1087
          %1108 = vst [vmem:[%s1101 + $0x18] sm:$0xf] %v1088
          %1109 = vst [vmem:[%s1101 + $0x1c] sm:$0xf] %v1089
          %1110 = vst [vmem:[%s1101 + $0x20] sm:$0xf] %v1090
          %1111 = vst [vmem:[%s1101 + $0x24] sm:$0xf] %v1091
          %1112 = vst [vmem:[%s1101 + $0x28] sm:$0xf] %v1092
          %1113 = vst [vmem:[%s1101 + $0x2c] sm:$0xf] %v1093
          %1114 = vst [vmem:[%s1101 + $0x30] sm:$0xf] %v1094
          %1115 = vst [vmem:[%s1101 + $0x34] sm:$0xf] %v1095
          %1116 = vst [vmem:[%s1101 + $0x38] sm:$0xf] %v1096
          %1117 = vst [vmem:[%s1101 + $0x3c] sm:$0xf] %v1097
          %p1118 = scmp.eq.s32.totalorder %s29, 4
          // Predicated region
          $region90: #{tpu_custom_call.1} parent=88 // pred_check
            %p1119 = pneg %p1118
          $region91: #{tpu_custom_call.1} parent=88 // pred_check_branch
            %1121 = sbr.rel (%p1119) target = $region93
          $region92: #{tpu_custom_call.1} parent=88 // pred_region
            %v1122 = vld [vmem:[%s383] sm:$0xf]
            %v1139 = vunpack.c.l.b16 %v1082
            %v1140 = vunpack.c.l.b16 %v1083
            %v1141 = vunpack.c.l.b16 %v1084
            %v1142 = vunpack.c.l.b16 %v1085
            %v1143 = vunpack.c.l.b16 %v1086
            %v1144 = vunpack.c.l.b16 %v1087
            %v1145 = vunpack.c.l.b16 %v1088
            %v1146 = vunpack.c.l.b16 %v1089
            %v1147 = vunpack.c.l.b16 %v1090
            %v1148 = vunpack.c.l.b16 %v1091
            %v1149 = vunpack.c.l.b16 %v1092
            %v1150 = vunpack.c.l.b16 %v1093
            %v1151 = vunpack.c.l.b16 %v1094
            %v1152 = vunpack.c.l.b16 %v1095
            %v1153 = vunpack.c.l.b16 %v1096
            %v1154 = vunpack.c.l.b16 %v1097
            %v1155 = vpack.c.b16 %v1140, %v1139
            %v1156 = vpack.c.b16 %v1142, %v1141
            %v1157 = vpack.c.b16 %v1144, %v1143
            %v1158 = vpack.c.b16 %v1146, %v1145
            %v1159 = vpack.c.b16 %v1148, %v1147
            %v1160 = vpack.c.b16 %v1150, %v1149
            %v1161 = vpack.c.b16 %v1152, %v1151
            %v1162 = vpack.c.b16 %v1154, %v1153
            %1171 = vmatpush.bf16.msra.mxu0 %v1162
            %1172 = vmatpush.bf16.msra.mxu0 %v1161
            %1173 = vmatpush.bf16.msra.mxu0 %v1160
            %1174 = vmatpush.bf16.msra.mxu0 %v1159
            %1175 = vmatpush.bf16.msra.mxu0 %v1158
            %1176 = vmatpush.bf16.msra.mxu0 %v1157
            %1177 = vmatpush.bf16.msra.mxu0 %v1156
            %1178 = vmatpush.bf16.msra.mxu0 %v1155
            %1179 = vmatmul.bf16.gmra.mxu0 %v1122
            %v1180 = vpop.f32.mrf.mxu0
            %v1181 = vadd.f32 0.0, %v1180
            %v1182 = vpop.f32.mrf.mxu0
            %1183 = vdwg.mxu0
            %v1184 = vld [vmem:[#allocation15] sm:$0xf]
            %1185 = vmatpush.bf16.msra.mxu0 %v1162
            %1186 = vmatpush.bf16.msra.mxu0 %v1161
            %1187 = vmatpush.bf16.msra.mxu0 %v1160
            %1188 = vmatpush.bf16.msra.mxu0 %v1159
            %1189 = vmatpush.bf16.msra.mxu0 %v1158
            %1190 = vmatpush.bf16.msra.mxu0 %v1157
            %1191 = vmatpush.bf16.msra.mxu0 %v1156
            %1192 = vmatpush.bf16.msra.mxu0 %v1155
            %1193 = vmatmul.bf16.gmra.mxu0 %v1184
            %v1194 = vpop.f32.mrf.mxu0
            %v1195 = vadd.f32 0.0, %v1194
            %v1196 = vpop.f32.mrf.mxu0
            %1197 = vdwg.mxu0
            // Predicated region
            $region94: #{tpu_custom_call.1} parent=92 // pred_check
              %p1198 = pneg %p387
            $region95: #{tpu_custom_call.1} parent=92 // pred_check_branch
              %1200 = sbr.rel (%p1198) target = $region97
            $region96: #{tpu_custom_call.1} parent=92 // pred_region
              %1201 = vst [vmem:[#allocation4] sm:$0xff] %v1181
              %1202 = vst [vmem:[#allocation5] sm:$0xff] %v1195
            $region97: #{tpu_custom_call.1} parent=92 // pred_fallthru
              _
            %p1203 = scmp.gt.s32.totalorder %s30, 0
            // Predicated region
            $region98: #{tpu_custom_call.1} parent=92 // pred_check
              %p1204 = pneg %p1203
            $region99: #{tpu_custom_call.1} parent=92 // pred_check_branch
              %1206 = sbr.rel (%p1204) target = $region101
            $region100: #{tpu_custom_call.1} parent=92 // pred_region
              %v1207 = vld [vmem:[#allocation4] sm:$0xff]
              %v1208 = vadd.f32 %v1207, %v1181
              %1209 = vst [vmem:[#allocation4] sm:$0xff] %v1208
              %v1210 = vld [vmem:[#allocation5] sm:$0xff]
              %v1211 = vadd.f32 %v1210, %v1195
              %1212 = vst [vmem:[#allocation5] sm:$0xff] %v1211
            $region101: #{tpu_custom_call.1} parent=92 // pred_fallthru
              _
            // Predicated region
            $region102: #{tpu_custom_call.1} parent=92 // pred_check
              %p1213 = pneg %p387
            $region103: #{tpu_custom_call.1} parent=92 // pred_check_branch
              %1215 = sbr.rel (%p1213) target = $region105
            $region104: #{tpu_custom_call.1} parent=92 // pred_region
              %v1216 = vld [vmem:[#allocation4] sm:$0xff]
              %s1217 = scalar_lea.vmem [#allocation10], 640
              %v1218 = vld [vmem:[%s1217] sm:$0xff]
              %v1219 = vld [vmem:[%s1217 + $0x8] sm:$0xff]
              %v1220 = vld [vmem:[%s1217 + $0x10] sm:$0xff]
              %v1221 = vld [vmem:[%s1217 + $0x18] sm:$0xff]
              %v1222 = vld [vmem:[%s1217 + $0x20] sm:$0xff]
              %v1223 = vld [vmem:[%s1217 + $0x28] sm:$0xff]
              %v1224 = vld [vmem:[%s1217 + $0x30] sm:$0xff]
              %v1225 = vld [vmem:[%s1217 + $0x38] sm:$0xff]
              %v1226 = vld [vmem:[%s1217 + $0x40] sm:$0xff]
              %v1227 = vld [vmem:[%s1217 + $0x48] sm:$0xff]
              %v1228 = vld [vmem:[%s1217 + $0x50] sm:$0xff]
              %v1229 = vld [vmem:[%s1217 + $0x58] sm:$0xff]
              %v1230 = vld [vmem:[%s1217 + $0x60] sm:$0xff]
              %v1231 = vld [vmem:[%s1217 + $0x68] sm:$0xff]
              %v1232 = vld [vmem:[%s1217 + $0x70] sm:$0xff]
              %v1233 = vld [vmem:[%s1217 + $0x78] sm:$0xff]
              %v1234 = vld [vmem:[#allocation5] sm:$0xff]
              %s1235 = scalar_lea.vmem [#allocation12], 640
              %v1236 = vld [vmem:[%s1235] sm:$0xff]
              %v1237 = vld [vmem:[%s1235 + $0x8] sm:$0xff]
              %v1238 = vld [vmem:[%s1235 + $0x10] sm:$0xff]
              %v1239 = vld [vmem:[%s1235 + $0x18] sm:$0xff]
              %v1240 = vld [vmem:[%s1235 + $0x20] sm:$0xff]
              %v1241 = vld [vmem:[%s1235 + $0x28] sm:$0xff]
              %v1242 = vld [vmem:[%s1235 + $0x30] sm:$0xff]
              %v1243 = vld [vmem:[%s1235 + $0x38] sm:$0xff]
              %v1244 = vld [vmem:[%s1235 + $0x40] sm:$0xff]
              %v1245 = vld [vmem:[%s1235 + $0x48] sm:$0xff]
              %v1246 = vld [vmem:[%s1235 + $0x50] sm:$0xff]
              %v1247 = vld [vmem:[%s1235 + $0x58] sm:$0xff]
              %v1248 = vld [vmem:[%s1235 + $0x60] sm:$0xff]
              %v1249 = vld [vmem:[%s1235 + $0x68] sm:$0xff]
              %v1250 = vld [vmem:[%s1235 + $0x70] sm:$0xff]
              %v1251 = vld [vmem:[%s1235 + $0x78] sm:$0xff]
              %1252 = vmatpush.msra.mxu0 %v1251
              %1253 = vmatpush.msra.mxu0 %v1250
              %1254 = vmatpush.msra.mxu0 %v1249
              %1255 = vmatpush.msra.mxu0 %v1248
              %1256 = vmatpush.msra.mxu0 %v1247
              %1257 = vmatpush.msra.mxu0 %v1246
              %1258 = vmatpush.msra.mxu0 %v1245
              %1259 = vmatpush.msra.mxu0 %v1244
              %1260 = vmatpush.msra.mxu0 %v1243
              %1261 = vmatpush.msra.mxu0 %v1242
              %1262 = vmatpush.msra.mxu0 %v1241
              %1263 = vmatpush.msra.mxu0 %v1240
              %1264 = vmatpush.msra.mxu0 %v1239
              %1265 = vmatpush.msra.mxu0 %v1238
              %1266 = vmatpush.msra.mxu0 %v1237
              %1267 = vmatpush.msra.mxu0 %v1236
              %1268 = vmatmul.f32.gmra.mxu0 %v1234
              %v1269 = vpop.f32.mrf.mxu0
              %v1270 = vadd.f32 0.0, %v1269
              %1271 = vdwg.mxu0
              %1272 = vmatpush.msra.mxu0 %v1233
              %1273 = vmatpush.msra.mxu0 %v1232
              %1274 = vmatpush.msra.mxu0 %v1231
              %1275 = vmatpush.msra.mxu0 %v1230
              %1276 = vmatpush.msra.mxu0 %v1229
              %1277 = vmatpush.msra.mxu0 %v1228
              %1278 = vmatpush.msra.mxu0 %v1227
              %1279 = vmatpush.msra.mxu0 %v1226
              %1280 = vmatpush.msra.mxu0 %v1225
              %1281 = vmatpush.msra.mxu0 %v1224
              %1282 = vmatpush.msra.mxu0 %v1223
              %1283 = vmatpush.msra.mxu0 %v1222
              %1284 = vmatpush.msra.mxu0 %v1221
              %1285 = vmatpush.msra.mxu0 %v1220
              %1286 = vmatpush.msra.mxu0 %v1219
              %1287 = vmatpush.msra.mxu0 %v1218
              %1288 = vmatmul.f32.gmra.mxu0 %v1216
              %v1289 = vpop.f32.mrf.mxu0
              %v1290 = vadd.f32 %v1270, %v1289
              %1291 = vdwg.mxu0
              %s1292 = scalar_lea.vmem [#allocation13], 5
              %v1293 = vld [vmem:[%s1292] sm:$0x1]
              %v1295 = vperm.slane %v1293, 0
              %v1297 = vadd.f32 %v1290, %v1295
              %1298 = vst [vmem:[#allocation16] sm:$0xff] %v1297
            $region105: #{tpu_custom_call.1} parent=92 // pred_fallthru
              _
          $region93: #{tpu_custom_call.1} parent=88 // pred_fallthru
            _
        $region89: #{tpu_custom_call.1} parent=43 // pred_fallthru
          _
        // Predicated region
        $region106: #{tpu_custom_call.1} parent=43 // pred_check
          %p1299 = pneg %p205
        $region107: #{tpu_custom_call.1} parent=43 // pred_check_branch
          %1301 = sbr.rel (%p1299) target = $region109
        $region108: #{tpu_custom_call.1} parent=43 // pred_region
          %1303 = vsyncadd [#allocation9], 0
          %s1305 = sshll.u32 [#allocation16], 4
          %s1306 = int_to_ptr.vmem [resolvable:$true] %s1305
          %s1307 = sshll.u32 %s7, 4
          %s1308 = int_to_ptr.hbm [resolvable:$true] %s1307
          %1310 = dma.vmem_to_hbm [thread:$0]  %s1306, 128, %s1308, [#allocation9]
        $region109: #{tpu_custom_call.1} parent=43 // pred_fallthru
          _
        // Predicated region
        $region110: #{tpu_custom_call.1} parent=43 // pred_check
          %p1311 = pneg %p205
        $region111: #{tpu_custom_call.1} parent=43 // pred_check_branch
          %1313 = sbr.rel (%p1311) target = $region113
        $region112: #{tpu_custom_call.1} parent=43 // pred_region
          %1315 = dma.done [#allocation9], 128
        $region113: #{tpu_custom_call.1} parent=43 // pred_fallthru
          _
      $region44: #{tpu_custom_call.1} parent=5 // pred_fallthru
        _
      %p1316 = scmp.le.s32.totalorder 2, %s19
      // Predicated region
      $region114: #{tpu_custom_call.1} parent=5 // pred_check
        %p1317 = pneg %p1316
      $region115: #{tpu_custom_call.1} parent=5 // pred_check_branch
        %1319 = sbr.rel (%p1317) target = $region117
      $region116: #{tpu_custom_call.1} parent=5 // pred_region
        %s1320 = ssub.s32 %s19, 2
      $region117: #{tpu_custom_call.1} parent=5 // pred_fallthru
        _
    $region6: #{tpu_custom_call.1} parent=1 // loop_footer
      %s23 = sadd.s32 1, %s19
    $region7: #{tpu_custom_call.1} parent=1 // loop_footer_branch
      %18 = sbr.rel target = $region3
    $region8: #{tpu_custom_call.1} parent=1 // loop_exit
      _
    %1321 = vsyncpa [#allocation8], 1
    %s1322 = scalar_lea.sflag [#allocation8], 1
    %1323 = vsyncpa %s1322, 1
    %1324 = vsyncpa [#allocation11], 1
    %1325 = vsyncpa [#allocation14], 1
    %1326 = vsyncpa [#allocation9], 1
    %s1327 = scalar_lea.sflag [#allocation9], 1
    %1328 = vsyncpa %s1327, 1

</llo_original>
